<compile_context>
chip_gen: v7x
topology: tpu7x:2x2x1
jax: 0.10.0
libtpu: 0.0.40
codegen_flags: <defaults>
</compile_context>

<pallas_src>
import functools

import jax
import jax.numpy as jnp
from jax import lax
from jax.experimental import pallas as pl
from jax.experimental.pallas import tpu as pltpu

_EPS = 1e-12  # torch.nn.functional.normalize default eps


def _similarity_kernel(v_ref, tT_ref, o_ref, *scratch,
                       scale, normalize, nn, n_tiles, precision):
    # v_ref:  (1, NN, TT, d)  tile of v_feat (native dtype)
    # tT_ref: (d, c)          pre-normalized / pre-transposed text features
    # o_ref:  (1, c, TT)      output tile (lane-dense: last dim = TT)
    # scratch: () in fused-n mode, (acc_ref,) with shape (TT, c) f32 otherwise.
    tT = tT_ref[...]                                            # (d, c)

    part = None
    for j in range(nn):                                         # nn is small & static
        v = v_ref[0, j]                                         # (TT, d), native dtype
        raw = jnp.dot(v, tT, preferred_element_type=jnp.float32,
                      precision=precision)                      # (TT, c) f32
        if normalize:
            # (v * inv_row) @ tT == inv_row * (v @ tT); the row scale is
            # (TT, c) work instead of a (TT, d) VPU pass before the MXU.
            vf = v.astype(jnp.float32)
            sumsq = jnp.sum(vf * vf, axis=-1, keepdims=True)    # (TT, 1)
            raw = raw * lax.rsqrt(jnp.maximum(sumsq, _EPS * _EPS))
        part = raw if part is None else part + raw

    if n_tiles == 1:
        # Fused-n path: no accumulator RMW, single lane-dense store.
        o_ref[0] = (part * scale).T.astype(o_ref.dtype)
    else:
        acc_ref = scratch[0]
        ni = pl.program_id(2)

        @pl.when(ni == 0)
        def _init():
            acc_ref[...] = jnp.zeros_like(acc_ref)

        acc_ref[...] += part

        @pl.when(ni == n_tiles - 1)
        def _finalize():
            o_ref[0] = (acc_ref[...] * scale).T.astype(o_ref.dtype)


def _pick_tiles(n, t, d, itemsize, budget):
    """Pick (TT, NN): lane-dense time tile and n-block within a VMEM budget.

    Preference: fuse the whole n axis (removes the reduction grid axis and the
    accumulator read-modify-write), with TT as large as the budget allows.
    """
    if t <= 128:
        tt_cands = [t]                       # full-t block is always legal
    else:
        tt_cands = [tt for tt in (4096, 2048, 1024, 512, 256, 128) if tt <= t]
    # Whole-n block (preferred).
    for tt in tt_cands:
        if n * tt * d * itemsize <= budget:
            return tt, n
    # Per-crop blocks; n becomes the (innermost) reduction grid axis.
    for tt in tt_cands:
        if tt * d * itemsize <= budget:
            return tt, 1
    return tt_cands[-1], 1


def similarity_forward(v_feat, t_feat, is_training, *, train_sig_T, test_sig_T):
    """Pallas implementation of Similarity.forward.

    v_feat: (b, n, t, d) float32 or bfloat16
    t_feat: (c, d) float32 or bfloat16
    returns: (b, c, t)
    """
    b, n, t, d = v_feat.shape
    c, d2 = t_feat.shape
    assert d == d2

    tau = float(train_sig_T) if is_training else float(test_sig_T)
    normalize = not is_training

    compute_dtype = v_feat.dtype
    out_dtype = jnp.result_type(v_feat.dtype, t_feat.dtype)
    itemsize = jnp.dtype(compute_dtype).itemsize

    # Tiny, grid-invariant text-feature prep hoisted out of the kernel:
    # normalize (eval mode) in f32 and transpose to (d, c); cast to the v dtype
    # so the MXU sees a single native-dtype operand pair.
    tf = t_feat.astype(jnp.float32)
    if normalize:
        nrm = jnp.sqrt(jnp.sum(tf * tf, axis=-1, keepdims=True))
        tf = tf / jnp.maximum(nrm, _EPS)
    tT = tf.T.astype(compute_dtype)          # (d, c)

    # Generation-aware VMEM budget (v7x has 64 MiB/TC vs 128 MiB on v5e/v6e).
    try:
        vmem_cap = int(getattr(pltpu.get_tpu_info(), "vmem_capacity_bytes",
                               64 * 1024 * 1024))
    except Exception:  # pragma: no cover - conservative fallback
        vmem_cap = 64 * 1024 * 1024
    vmem_cap = min(max(vmem_cap, 32 * 1024 * 1024), 128 * 1024 * 1024)
    budget = max(vmem_cap // 16, 2 * 1024 * 1024)   # per v-tile buffer

    TT, NN = _pick_tiles(n, t, d, itemsize, budget)
    t_tiles = pl.cdiv(t, TT)
    n_tiles = n // NN
    scale = 1.0 / (tau * n)                  # folds the n-mean and 1/tau

    # Exact f32 matmul when operands are f32 (matches the f32 reference);
    # bf16 operands go to the MXU natively.
    precision = (lax.Precision.HIGHEST
                 if jnp.dtype(compute_dtype) == jnp.float32 else None)

    kernel = functools.partial(
        _similarity_kernel, scale=scale, normalize=normalize,
        nn=NN, n_tiles=n_tiles, precision=precision)

    # Scoped-VMEM sizing: double-buffered v tile + tT + out block (+ acc).
    v_bytes = NN * TT * d * itemsize
    t_bytes = d * c * itemsize
    o_bytes = c * TT * jnp.dtype(out_dtype).itemsize
    acc_bytes = TT * c * 4 if n_tiles > 1 else 0
    need = 2 * (v_bytes + t_bytes + o_bytes) + acc_bytes
    vmem_limit = int(min(max(2 * need + (2 << 20), 16 * 1024 * 1024),
                         (vmem_cap * 3) // 4))

    if n_tiles == 1:
        # Fully parallel grid (megacore shards both axes on v7x).
        grid = (b, t_tiles)
        in_specs = [
            pl.BlockSpec((1, NN, TT, d), lambda bi, ti: (bi, 0, ti, 0)),
            pl.BlockSpec((d, c), lambda bi, ti: (0, 0)),
        ]
        out_specs = pl.BlockSpec((1, c, TT), lambda bi, ti: (bi, 0, ti))
        scratch_shapes = []
        dims = ("parallel", "parallel")
    else:
        # n is the reduction axis (last in grid), accumulated in VMEM scratch.
        grid = (b, t_tiles, n_tiles)
        in_specs = [
            pl.BlockSpec((1, NN, TT, d), lambda bi, ti, ni: (bi, ni, ti, 0)),
            pl.BlockSpec((d, c), lambda bi, ti, ni: (0, 0)),
        ]
        out_specs = pl.BlockSpec((1, c, TT), lambda bi, ti, ni: (bi, 0, ti))
        scratch_shapes = [pltpu.VMEM((TT, c), jnp.float32)]
        dims = ("parallel", "parallel", "arbitrary")

    return pl.pallas_call(
        kernel,
        out_shape=jax.ShapeDtypeStruct((b, c, t), out_dtype),
        grid_spec=pltpu.PrefetchScalarGridSpec(
            num_scalar_prefetch=0,
            grid=grid,
            in_specs=in_specs,
            out_specs=out_specs,
            scratch_shapes=scratch_shapes,
        ),
        compiler_params=pltpu.CompilerParams(
            dimension_semantics=dims,
            vmem_limit_bytes=vmem_limit,
        ),
    )(v_feat, tT)


def _reference(v_feat, t_feat, is_training, train_sig_T, test_sig_T):
    """Pure-JAX transliteration of the PyTorch forward (for verification)."""
    b, n, t, d = v_feat.shape
    tf = jnp.broadcast_to(t_feat[None, None], (b, n) + t_feat.shape)  # (b,n,c,d)
    v = v_feat
    if is_training:
        tau = train_sig_T
    else:
        tau = test_sig_T
        v = v / jnp.maximum(jnp.linalg.norm(v, axis=-1, keepdims=True), _EPS)
        tf = tf / jnp.maximum(jnp.linalg.norm(tf, axis=-1, keepdims=True), _EPS)
    dist = jnp.einsum("bntd,bmcd->bctnm", v, tf,
                      precision=lax.Precision.HIGHEST) / tau
    return jnp.mean(jnp.mean(dist, axis=-1), axis=-1)


if __name__ == "__main__":
    key = jax.random.PRNGKey(0)
    train_sig_T, test_sig_T = 0.1, 0.07  # deterministic "params" from __init__

    ok = True
    # (b, n, t, d, c): small shapes consistent with the module's forward.
    for (b, n, t, d, c) in ((2, 3, 8, 32, 5), (1, 4, 256, 64, 7)):
        key, k1, k2 = jax.random.split(key, 3)
        v_feat = jax.random.normal(k1, (b, n, t, d), dtype=jnp.float32)
        t_feat = jax.random.normal(k2, (c, d), dtype=jnp.float32)

        for is_training in (True, False):
            out = similarity_forward(
                v_feat, t_feat, is_training,
                train_sig_T=train_sig_T, test_sig_T=test_sig_T,
            )
            out = jax.block_until_ready(out)
            ref = _reference(v_feat, t_feat, is_training, train_sig_T, test_sig_T)
            assert out.shape == (b, c, t)
            close = bool(jnp.allclose(out, ref, atol=1e-3, rtol=1e-3))
            assert close, (b, n, t, d, c, is_training)
            ok = ok and close

    if ok:
        print("KERNEL_OK")
</pallas_src>

<mosaic_0001>
module attributes {stable_mosaic.version = 11 : i64} {
  func.func @_similarity_kernel(%arg0: i32, %arg1: i32, %arg2: memref<1x3x8x32xf32, #tpu.memory_space<vmem>>, %arg3: memref<32x5xf32, #tpu.memory_space<vmem>>, %arg4: memref<1x5x8xf32, #tpu.memory_space<vmem>>) attributes {dimension_semantics = [#tpu.dimension_semantics<parallel>, #tpu.dimension_semantics<parallel>], iteration_bounds = array<i64: 2, 1>, scalar_prefetch = 0 : i64, scratch_operands = 0 : i64, tpu.core_type = #tpu.core_type<tc>, window_params = [{transform_indices = @transform_0, window_bounds = array<i64: 1, 3, 8, 32>}, {pipeline_mode = #tpu.pipeline_mode<synchronous>, transform_indices = @transform_1, window_bounds = array<i64: 32, 5>}, {transform_indices = @transform_2, window_bounds = array<i64: 1, 5, 8>}]} {
    %c0 = arith.constant 0 : index
    %c0_0 = arith.constant 0 : index
    %0 = vector.load %arg3[%c0, %c0_0] : memref<32x5xf32, #tpu.memory_space<vmem>>, vector<32x5xf32>
    %c0_1 = arith.constant 0 : index
    %c0_2 = arith.constant 0 : index
    %c0_3 = arith.constant 0 : index
    %c0_4 = arith.constant 0 : index
    %1 = vector.load %arg2[%c0_1, %c0_2, %c0_3, %c0_4] : memref<1x3x8x32xf32, #tpu.memory_space<vmem>>, vector<1x1x8x32xf32>
    %2 = vector.shape_cast %1 : vector<1x1x8x32xf32> to vector<8x32xf32>
    %cst = arith.constant dense<0.000000e+00> : vector<8x5xf32>
    %3 = tpu.matmul %2, %0, %cst {dimension_numbers = #tpu.dot_dimension_numbers<[1], [0], [0], [1], [0, 0, 1, 1], [], []>, precision = #tpu.contract_precision<fp32>} : vector<8x32xf32>, vector<32x5xf32>, vector<8x5xf32> -> vector<8x5xf32>
    %c0_5 = arith.constant 0 : index
    %c1 = arith.constant 1 : index
    %c0_6 = arith.constant 0 : index
    %c0_7 = arith.constant 0 : index
    %4 = vector.load %arg2[%c0_5, %c1, %c0_6, %c0_7] : memref<1x3x8x32xf32, #tpu.memory_space<vmem>>, vector<1x1x8x32xf32>
    %5 = vector.shape_cast %4 : vector<1x1x8x32xf32> to vector<8x32xf32>
    %cst_8 = arith.constant dense<0.000000e+00> : vector<8x5xf32>
    %6 = tpu.matmul %5, %0, %cst_8 {dimension_numbers = #tpu.dot_dimension_numbers<[1], [0], [0], [1], [0, 0, 1, 1], [], []>, precision = #tpu.contract_precision<fp32>} : vector<8x32xf32>, vector<32x5xf32>, vector<8x5xf32> -> vector<8x5xf32>
    %7 = arith.addf %3, %6 : vector<8x5xf32>
    %c0_9 = arith.constant 0 : index
    %c2 = arith.constant 2 : index
    %c0_10 = arith.constant 0 : index
    %c0_11 = arith.constant 0 : index
    %8 = vector.load %arg2[%c0_9, %c2, %c0_10, %c0_11] : memref<1x3x8x32xf32, #tpu.memory_space<vmem>>, vector<1x1x8x32xf32>
    %9 = vector.shape_cast %8 : vector<1x1x8x32xf32> to vector<8x32xf32>
    %cst_12 = arith.constant dense<0.000000e+00> : vector<8x5xf32>
    %10 = tpu.matmul %9, %0, %cst_12 {dimension_numbers = #tpu.dot_dimension_numbers<[1], [0], [0], [1], [0, 0, 1, 1], [], []>, precision = #tpu.contract_precision<fp32>} : vector<8x32xf32>, vector<32x5xf32>, vector<8x5xf32> -> vector<8x5xf32>
    %11 = arith.addf %7, %10 : vector<8x5xf32>
    %cst_13 = arith.constant 3.33333325 : f32
    %12 = vector.broadcast %cst_13 : f32 to vector<8x5xf32>
    %13 = arith.mulf %11, %12 : vector<8x5xf32>
    %14 = tpu.transpose %13, [1, 0] : vector<8x5xf32> -> vector<5x8xf32>
    %c0_14 = arith.constant 0 : index
    %c0_15 = arith.constant 0 : index
    %c0_16 = arith.constant 0 : index
    %15 = vector.load %arg4[%c0_14, %c0_15, %c0_16] : memref<1x5x8xf32, #tpu.memory_space<vmem>>, vector<1x5x8xf32>
    %16 = vector.shape_cast %15 : vector<1x5x8xf32> to vector<5x8xf32>
    %17 = vector.shape_cast %14 : vector<5x8xf32> to vector<1x5x8xf32>
    tpu.vector_store %arg4[%c0_14, %c0_15, %c0_16], %17 {strides = array<i32>} : memref<1x5x8xf32, #tpu.memory_space<vmem>>, vector<1x5x8xf32>,
    return
  }
  func.func @transform_0(%arg0: i32, %arg1: i32) -> (i32, i32, i32, i32) {
    %c0_i32 = arith.constant 0 : i32
    %c0_i32_0 = arith.constant 0 : i32
    %c0_i32_1 = arith.constant 0 : i32
    return %arg0, %c0_i32, %arg1, %c0_i32_0 : i32, i32, i32, i32
  }
  func.func @transform_1(%arg0: i32, %arg1: i32) -> (i32, i32) {
    %c0_i32 = arith.constant 0 : i32
    %c0_i32_0 = arith.constant 0 : i32
    %c0_i32_1 = arith.constant 0 : i32
    return %c0_i32, %c0_i32_0 : i32, i32
  }
  func.func @transform_2(%arg0: i32, %arg1: i32) -> (i32, i32, i32) {
    %c0_i32 = arith.constant 0 : i32
    %c0_i32_0 = arith.constant 0 : i32
    return %arg0, %c0_i32, %arg1 : i32, i32, i32
  }
}

</mosaic_0001>

<llo_original>
// kernel: tpu_custom_call.1
$region0: #{tpu_custom_call.1}
  #allocation0 [shape = 'u32[]', space=smem, size = 0x4, offset = 0x4, fixed_abs, tag = 'smem constant byte address 0x4 - core index']
  #allocation1 [shape = 'u32[144,128]{1,0:T(1,128)}', space=vmem, size = 0x12000, scoped, tag = 'internal scratch']
  %s0 = inlined_call_operand.hbm [shape: f32[2,3,8,32], index: 0, kind: input, shape index: {}]
  %s1 = inlined_call_operand.vmem [shape: f32[32,5], index: 1, kind: input, shape index: {}]
  %s2 = inlined_call_operand.vmem [shape: f32[2,5,8], index: 2, kind: output, shape index: {}]
  %s3 = sld [smem:[#allocation0]]
  $region45: #{tpu_custom_call.1} parent=0
    _
  %s5 = ssub.s32 1, %s3
  %s6 = scalar_select 0, %s5, %s3
  $region1: #{tpu_custom_call.1} parent=0
    #allocation2 [shape = 'u8[24576]{0}', space=vmem, size = 0x6000, scoped, tag = 'input window, operand 0']
    #allocation3 [shape = 's32[2]{0}', space=sflag, size = 0x8, scoped, tag = 'scoped memory for tpu_custom_call.1']
    %7 = vsyncpa [#allocation3], 0
    %s8 = scalar_lea.sflag [#allocation3], 1
    %9 = vsyncpa %s8, 0
    loop: start=0, step=1, limit=4
    $region2: #{tpu_custom_call.1} parent=1 // loop_pre_header
      _
    $region3: #{tpu_custom_call.1} parent=1 // loop_header
      %s11 = sphi 0, %s15
      %p12 = scmp.ge.s32.totalorder %s11, 4
      %s18 = sphi 0, %s30
      %s19 = sphi 0, %s26
      %s20 = sphi 0, %s18
      %s21 = sphi 0, %s19
      %s22 = sphi 0, %s20
      %s23 = sphi 0, %s21
      %s35 = sphi 0, %s37
      %s38 = sphi 0, %s35
      %s39 = sphi 0, %s38
      %s55 = sphi 0, %s39
      %s59 = sphi 0, %s59
      %s61 = sphi 0, %s59
      %s62 = sphi 0, %s61
      %s76 = sphi 0, %s62
      %s84 = sphi 0, %s86
      %s87 = sphi 0, %s84
      %s88 = sphi 0, %s87
      %s104 = sphi 0, %s88
    $region4: #{tpu_custom_call.1} parent=1 // loop_header_branch
      %14 = sbr.rel (%p12) target = $region8
    $region5: #{tpu_custom_call.1} parent=1 // loop_body
      %s16 = ssub.s32 %s11, 1
      %s17 = ssub.s32 %s11, 2
      %s24 = sadd.s32 1, %s19
      %p25 = scmp.ge.s32.totalorder %s24, 1
      %s26 = scalar_select %p25, 0, %s24
      %s27 = sadd.s32 1, %s18
      %s28 = scalar_select %p25, %s27, %s18
      %p29 = scmp.ge.s32.totalorder %s28, 2
      %s30 = scalar_select %p29, 0, %s28
      %s31 = ssub.s32 %s18, %s30
      %s32 = ssub.s32 %s19, %s26
      %s33 = sor.u32 %s31, %s32
      %p34 = scmp.eq.s32.totalorder %s33, 0
      %s36 = sadd.s32 %s35, 1
      %s37 = scalar_select %p34, %s35, %s36
      %p40 = pneg %p34
      %p41 = scmp.eq.s32.totalorder %s11, 1
      %p42 = por %p40, %p41
      %p43 = scmp.ne.s32.totalorder %s35, %s38
      %p44 = scmp.eq.s32.totalorder %s11, 0
      %p45 = por %p43, %p44
      %p46 = scmp.ne.s32.totalorder %s35, %s38
      %p47 = scmp.eq.s32.totalorder %s16, 1
      %p48 = por %p46, %p47
      %p49 = scmp.ne.s32.totalorder %s38, %s39
      %p50 = scmp.eq.s32.totalorder %s16, 0
      %p51 = por %p49, %p50
      %p52 = scmp.ne.s32.totalorder %s38, %s39
      %p53 = scmp.eq.s32.totalorder %s17, 1
      %p54 = por %p52, %p53
      %p56 = scmp.ne.s32.totalorder %s39, %s55
      %p57 = scmp.eq.s32.totalorder %s17, 0
      %p58 = por %p56, %p57
      %s60 = sadd.s32 %s59, 1
      %p63 = scmp.eq.s32.totalorder %s11, 1
      %p64 = scmp.ne.s32.totalorder %s59, %s61
      %p65 = scmp.eq.s32.totalorder %s11, 0
      %p66 = por %p64, %p65
      %p67 = scmp.ne.s32.totalorder %s59, %s61
      %p68 = scmp.eq.s32.totalorder %s16, 1
      %p69 = por %p67, %p68
      %p70 = scmp.ne.s32.totalorder %s61, %s62
      %p71 = scmp.eq.s32.totalorder %s16, 0
      %p72 = por %p70, %p71
      %p73 = scmp.ne.s32.totalorder %s61, %s62
      %p74 = scmp.eq.s32.totalorder %s17, 1
      %p75 = por %p73, %p74
      %p77 = scmp.ne.s32.totalorder %s62, %s76
      %p78 = scmp.eq.s32.totalorder %s17, 0
      %p79 = por %p77, %p78
      %s80 = ssub.s32 %s18, %s30
      %s81 = ssub.s32 %s19, %s26
      %s82 = sor.u32 %s80, %s81
      %p83 = scmp.eq.s32.totalorder %s82, 0
      %s85 = sadd.s32 %s84, 1
      %s86 = scalar_select %p83, %s84, %s85
      %p89 = pneg %p83
      %p90 = scmp.eq.s32.totalorder %s11, 1
      %p91 = por %p89, %p90
      %p92 = scmp.ne.s32.totalorder %s84, %s87
      %p93 = scmp.eq.s32.totalorder %s11, 0
      %p94 = por %p92, %p93
      %p95 = scmp.ne.s32.totalorder %s84, %s87
      %p96 = scmp.eq.s32.totalorder %s16, 1
      %p97 = por %p95, %p96
      %p98 = scmp.ne.s32.totalorder %s87, %s88
      %p99 = scmp.eq.s32.totalorder %s16, 0
      %p100 = por %p98, %p99
      %p101 = scmp.ne.s32.totalorder %s87, %s88
      %p102 = scmp.eq.s32.totalorder %s17, 1
      %p103 = por %p101, %p102
      %p105 = scmp.ne.s32.totalorder %s88, %s104
      %p106 = scmp.eq.s32.totalorder %s17, 0
      %p107 = por %p105, %p106
      %p108 = scmp.le.s32.totalorder 1, %s11
      %p109 = scmp.lt.s32.totalorder %s11, 3
      %p110 = pnand %p108, %p109
      %p111 = pneg %p110
      // Predicated region
      $region9: #{tpu_custom_call.1} parent=5 // pred_check
        _
      $region10: #{tpu_custom_call.1} parent=5 // pred_check_branch
        %113 = sbr.rel (%p110) target = $region12
      $region11: #{tpu_custom_call.1} parent=5 // pred_region
        %s114 = ssub.s32 %s11, 1
        // Predicated region
        $region13: #{tpu_custom_call.1} parent=11 // pred_check
          %p115 = pneg %p72
        $region14: #{tpu_custom_call.1} parent=11 // pred_check_branch
          %117 = sbr.rel (%p115) target = $region16
        $region15: #{tpu_custom_call.1} parent=11 // pred_region
          _
        $region16: #{tpu_custom_call.1} parent=11 // pred_fallthru
          _
      $region12: #{tpu_custom_call.1} parent=5 // pred_fallthru
        _
      %p118 = scmp.lt.s32.totalorder %s11, 2
      // Predicated region
      $region17: #{tpu_custom_call.1} parent=5 // pred_check
        %p119 = pneg %p118
      $region18: #{tpu_custom_call.1} parent=5 // pred_check_branch
        %121 = sbr.rel (%p119) target = $region20
      $region19: #{tpu_custom_call.1} parent=5 // pred_region
        // Predicated region
        $region21: #{tpu_custom_call.1} parent=19 // pred_check
          %p122 = pneg %p45
        $region22: #{tpu_custom_call.1} parent=19 // pred_check_branch
          %124 = sbr.rel (%p122) target = $region24
        $region23: #{tpu_custom_call.1} parent=19 // pred_region
          %s125 = sand.u32 %s35, 1
          %s126 = scalar_lea.sflag [#allocation3], %s125
          %s127 = sand.u32 %s35, 1
          %s128 = smul.addr %s127, 24
          %s129 = scalar_lea.vmem [#allocation2], %s128
          %s131 = ssub.s32 384, 384
          %132 = vsyncadd %s126, %s131
          %s133 = smul.addr %s18, 3
          %s134 = sadd.s32 %s19, %s133
          %s135 = smul.addr %s134, 128
          %s136 = scalar_lea.hbm %s0, %s135
          %s137 = sshll.u32 %s129, 4
          %s138 = int_to_ptr.vmem [resolvable:$true] %s137
          %143 = dma.hbm_to_vmem [thread:$0]  %s136, 384, %s138, %s126, 128, 128, 8
        $region24: #{tpu_custom_call.1} parent=19 // pred_fallthru
          _
      $region20: #{tpu_custom_call.1} parent=5 // pred_fallthru
        _
      %p144 = scmp.le.s32.totalorder 1, %s11
      %p145 = scmp.lt.s32.totalorder %s11, 3
      %p146 = pnand %p144, %p145
      %p147 = pneg %p146
      // Predicated region
      $region25: #{tpu_custom_call.1} parent=5 // pred_check
        _
      $region26: #{tpu_custom_call.1} parent=5 // pred_check_branch
        %149 = sbr.rel (%p146) target = $region28
      $region27: #{tpu_custom_call.1} parent=5 // pred_region
        %s150 = ssub.s32 %s11, 1
        %s151 = sand.u32 %s38, 1
        %s152 = scalar_lea.sflag [#allocation3], %s151
        %s153 = sand.u32 %s38, 1
        %s154 = smul.addr %s153, 24
        %s155 = scalar_lea.vmem [#allocation2], %s154
        // Predicated region
        $region29: #{tpu_custom_call.1} parent=27 // pred_check
          %p156 = pneg %p51
        $region30: #{tpu_custom_call.1} parent=27 // pred_check_branch
          %158 = sbr.rel (%p156) target = $region32
        $region31: #{tpu_custom_call.1} parent=27 // pred_region
          %159 = dma.done %s152, 384
        $region32: #{tpu_custom_call.1} parent=27 // pred_fallthru
          _
        %s160 = sand.u32 %s38, 1
        %s161 = scalar_lea.sflag [#allocation3], %s160
        %s162 = sand.u32 %s38, 1
        %s163 = smul.addr %s162, 24
        %s164 = scalar_lea.vmem [#allocation2], %s163
        %p165 = pneg %p51
        %p166 = pneg %p48
        %p167 = pneg %p72
        %p168 = pneg %p69
        %p169 = pneg %p100
        %p170 = pneg %p97
        %p171 = scmp.lt.s32.totalorder %s20, 1
        %s172 = scalar_select %p171, %s20, 1
        %p173 = scmp.lt.s32.totalorder %s21, 0
        %s174 = scalar_select %p173, %s21, 0
        %s175 = sadd.s32 %s174, %s172
        %s176 = smul.addr %s175, 8
        %s177 = scalar_lea.vmem %s2, %s176
        %p178 = scmp.lt.s32.totalorder %s20, 1
        %s179 = scalar_select %p178, %s20, 1
        %p180 = scmp.lt.s32.totalorder %s21, 0
        %s181 = scalar_select %p180, %s21, 0
        %s182 = sadd.s32 %s181, %s179
        %s183 = smul.addr %s182, 8
        %s184 = scalar_lea.vmem %s2, %s183
        %v185 = vld [vmem:[%s1] sm:$0xff]
        %v186 = vld [vmem:[%s1 + $0x8] sm:$0xff]
        %v187 = vld [vmem:[%s1 + $0x10] sm:$0xff]
        %v188 = vld [vmem:[%s1 + $0x18] sm:$0xff]
        %v189 = vld [vmem:[%s155] sm:$0xff]
        %s190 = scalar_lea.vmem %s155, 8 [#allocation2]
        %v191 = vld [vmem:[%s190] sm:$0xff]
        %vm192 = vcmask 261120
        %v194 = vsel %vm192, %v191, 0
        %196 = vmatprep.subr.mxu0 0.0
        %v197 = vand.u32 %v185, 4294901760
        %198 = vmatpush1.msra.mxu0 %v197
        %199 = vmatprep.subr.mxu0 0.0
        %v200 = vand.u32 %v186, 4294901760
        %201 = vmatpush1.msra.mxu0 %v200
        %202 = vmatprep.subr.mxu0 0.0
        %v203 = vand.u32 %v187, 4294901760
        %204 = vmatpush1.msra.mxu0 %v203
        %205 = vmatprep.subr.mxu0 0.0
        %v206 = vand.u32 %v188, 4294901760
        %207 = vmatpush1.msra.mxu0 %v206
        %208 = vmatprep.subr.mxu0 0.0
        %209 = vmatpush1.msra.mxu0 0.0
        %210 = vmatprep.subr.mxu0 0.0
        %211 = vmatpush1.msra.mxu0 0.0
        %212 = vmatprep.subr.mxu0 0.0
        %213 = vmatpush1.msra.mxu0 0.0
        %214 = vmatprep.subr.mxu0 0.0
        %215 = vmatpush1.msra.mxu0 0.0
        %216 = vmatprep.subr.mxu0 0.0
        %217 = vmatpush1.msra.mxu0 0.0
        %218 = vmatprep.subr.mxu0 0.0
        %219 = vmatpush1.msra.mxu0 0.0
        %220 = vmatprep.subr.mxu0 0.0
        %221 = vmatpush1.msra.mxu0 0.0
        %222 = vmatprep.subr.mxu0 0.0
        %223 = vmatpush1.msra.mxu0 0.0
        %224 = vmatprep.subr.mxu0 0.0
        %225 = vmatpush1.msra.mxu0 0.0
        %226 = vmatprep.subr.mxu0 0.0
        %227 = vmatpush1.msra.mxu0 0.0
        %228 = vmatprep.subr.mxu0 0.0
        %229 = vmatpush1.msra.mxu0 0.0
        %230 = vmatprep.subr.mxu0 0.0
        %231 = vmatpush1.msra.mxu0 0.0
        %232 = vmatprep.subr.mxu0 0.0
        %233 = vmatpush1.msra.mxu0 0.0
        %234 = vmatprep.subr.mxu0 0.0
        %235 = vmatpush1.msra.mxu0 0.0
        %236 = vmatprep.subr.mxu0 0.0
        %237 = vmatpush1.msra.mxu0 0.0
        %238 = vmatprep.subr.mxu0 0.0
        %239 = vmatpush1.msra.mxu0 0.0
        %240 = vmatprep.subr.mxu0 0.0
        %241 = vmatpush1.msra.mxu0 0.0
        %242 = vmatprep.subr.mxu0 0.0
        %243 = vmatpush1.msra.mxu0 0.0
        %244 = vmatprep.subr.mxu0 0.0
        %245 = vmatpush1.msra.mxu0 0.0
        %246 = vmatprep.subr.mxu0 0.0
        %247 = vmatpush1.msra.mxu0 0.0
        %248 = vmatprep.subr.mxu0 0.0
        %249 = vmatpush1.msra.mxu0 0.0
        %250 = vmatprep.subr.mxu0 0.0
        %251 = vmatpush1.msra.mxu0 0.0
        %252 = vmatprep.subr.mxu0 0.0
        %253 = vmatpush1.msra.mxu0 0.0
        %254 = vmatprep.subr.mxu0 0.0
        %255 = vmatpush1.msra.mxu0 0.0
        %256 = vmatprep.subr.mxu0 0.0
        %257 = vmatpush1.msra.mxu0 0.0
        %258 = vmatprep.subr.mxu0 0.0
        %259 = vmatpush1.msra.mxu0 0.0
        %260 = vmatprep.subr.mxu0 0.0
        %261 = vmatpush1.msra.mxu0 0.0
        %262 = vmatprep.subr.mxu0 0.0
        %263 = vmatpush1.msra.mxu0 0.0
        %264 = vmatprep.mubr.f32.mxu0 0.0
        %v265 = vand.u32 %v194, 4294901760
        %v266 = vsub.f32 %v194, %v265
        %v267 = vand.u32 %v266, 4294901760
        %v268 = vsub.f32 %v266, %v267
        %v269 = vand.u32 %v268, 4294901760
        %270 = vmatmul.mubr.f32.gmra.mrb[0].mxu0 %v269
        %v271 = vpop.f32.mrb[0].mxu0
        %v272 = vadd.f32 0.0, %v271
        %v273 = vpop.f32.mrb[0].mxu0
        %274 = vdwg.mxu0
        %275 = vmatprep.subr.mxu0 0.0
        %v276 = vand.u32 %v185, 4294901760
        %v277 = vsub.f32 %v185, %v276
        %v278 = vand.u32 %v277, 4294901760
        %v279 = vsub.f32 %v277, %v278
        %v280 = vand.u32 %v279, 4294901760
        %281 = vmatpush1.msra.mxu0 %v280
        %282 = vmatprep.subr.mxu0 0.0
        %v283 = vand.u32 %v186, 4294901760
        %v284 = vsub.f32 %v186, %v283
        %v285 = vand.u32 %v284, 4294901760
        %v286 = vsub.f32 %v284, %v285
        %v287 = vand.u32 %v286, 4294901760
        %288 = vmatpush1.msra.mxu0 %v287
        %289 = vmatprep.subr.mxu0 0.0
        %v290 = vand.u32 %v187, 4294901760
        %v291 = vsub.f32 %v187, %v290
        %v292 = vand.u32 %v291, 4294901760
        %v293 = vsub.f32 %v291, %v292
        %v294 = vand.u32 %v293, 4294901760
        %295 = vmatpush1.msra.mxu0 %v294
        %296 = vmatprep.subr.mxu0 0.0
        %v297 = vand.u32 %v188, 4294901760
        %v298 = vsub.f32 %v188, %v297
        %v299 = vand.u32 %v298, 4294901760
        %v300 = vsub.f32 %v298, %v299
        %v301 = vand.u32 %v300, 4294901760
        %302 = vmatpush1.msra.mxu0 %v301
        %303 = vmatprep.subr.mxu0 0.0
        %304 = vmatpush1.msra.mxu0 0.0
        %305 = vmatprep.subr.mxu0 0.0
        %306 = vmatpush1.msra.mxu0 0.0
        %307 = vmatprep.subr.mxu0 0.0
        %308 = vmatpush1.msra.mxu0 0.0
        %309 = vmatprep.subr.mxu0 0.0
        %310 = vmatpush1.msra.mxu0 0.0
        %311 = vmatprep.subr.mxu0 0.0
        %312 = vmatpush1.msra.mxu0 0.0
        %313 = vmatprep.subr.mxu0 0.0
        %314 = vmatpush1.msra.mxu0 0.0
        %315 = vmatprep.subr.mxu0 0.0
        %316 = vmatpush1.msra.mxu0 0.0
        %317 = vmatprep.subr.mxu0 0.0
        %318 = vmatpush1.msra.mxu0 0.0
        %319 = vmatprep.subr.mxu0 0.0
        %320 = vmatpush1.msra.mxu0 0.0
        %321 = vmatprep.subr.mxu0 0.0
        %322 = vmatpush1.msra.mxu0 0.0
        %323 = vmatprep.subr.mxu0 0.0
        %324 = vmatpush1.msra.mxu0 0.0
        %325 = vmatprep.subr.mxu0 0.0
        %326 = vmatpush1.msra.mxu0 0.0
        %327 = vmatprep.subr.mxu0 0.0
        %328 = vmatpush1.msra.mxu0 0.0
        %329 = vmatprep.subr.mxu0 0.0
        %330 = vmatpush1.msra.mxu0 0.0
        %331 = vmatprep.subr.mxu0 0.0
        %332 = vmatpush1.msra.mxu0 0.0
        %333 = vmatprep.subr.mxu0 0.0
        %334 = vmatpush1.msra.mxu0 0.0
        %335 = vmatprep.subr.mxu0 0.0
        %336 = vmatpush1.msra.mxu0 0.0
        %337 = vmatprep.subr.mxu0 0.0
        %338 = vmatpush1.msra.mxu0 0.0
        %339 = vmatprep.subr.mxu0 0.0
        %340 = vmatpush1.msra.mxu0 0.0
        %341 = vmatprep.subr.mxu0 0.0
        %342 = vmatpush1.msra.mxu0 0.0
        %343 = vmatprep.subr.mxu0 0.0
        %344 = vmatpush1.msra.mxu0 0.0
        %345 = vmatprep.subr.mxu0 0.0
        %346 = vmatpush1.msra.mxu0 0.0
        %347 = vmatprep.subr.mxu0 0.0
        %348 = vmatpush1.msra.mxu0 0.0
        %349 = vmatprep.subr.mxu0 0.0
        %350 = vmatpush1.msra.mxu0 0.0
        %351 = vmatprep.subr.mxu0 0.0
        %352 = vmatpush1.msra.mxu0 0.0
        %353 = vmatprep.subr.mxu0 0.0
        %354 = vmatpush1.msra.mxu0 0.0
        %355 = vmatprep.subr.mxu0 0.0
        %356 = vmatpush1.msra.mxu0 0.0
        %357 = vmatprep.subr.mxu0 0.0
        %358 = vmatpush1.msra.mxu0 0.0
        %359 = vmatprep.mubr.f32.mxu0 0.0
        %v360 = vand.u32 %v194, 4294901760
        %361 = vmatmul.mubr.f32.gmra.mrb[0].mxu0 %v360
        %v362 = vpop.f32.mrb[0].mxu0
        %v363 = vadd.f32 %v272, %v362
        %v364 = vpop.f32.mrb[0].mxu0
        %365 = vdwg.mxu0
        %366 = vmatprep.subr.mxu0 0.0
        %v367 = vand.u32 %v185, 4294901760
        %v368 = vsub.f32 %v185, %v367
        %369 = vmatpush1.msra.mxu0 %v368
        %370 = vmatprep.subr.mxu0 0.0
        %v371 = vand.u32 %v186, 4294901760
        %v372 = vsub.f32 %v186, %v371
        %373 = vmatpush1.msra.mxu0 %v372
        %374 = vmatprep.subr.mxu0 0.0
        %v375 = vand.u32 %v187, 4294901760
        %v376 = vsub.f32 %v187, %v375
        %377 = vmatpush1.msra.mxu0 %v376
        %378 = vmatprep.subr.mxu0 0.0
        %v379 = vand.u32 %v188, 4294901760
        %v380 = vsub.f32 %v188, %v379
        %381 = vmatpush1.msra.mxu0 %v380
        %382 = vmatprep.subr.mxu0 0.0
        %383 = vmatpush1.msra.mxu0 0.0
        %384 = vmatprep.subr.mxu0 0.0
        %385 = vmatpush1.msra.mxu0 0.0
        %386 = vmatprep.subr.mxu0 0.0
        %387 = vmatpush1.msra.mxu0 0.0
        %388 = vmatprep.subr.mxu0 0.0
        %389 = vmatpush1.msra.mxu0 0.0
        %390 = vmatprep.subr.mxu0 0.0
        %391 = vmatpush1.msra.mxu0 0.0
        %392 = vmatprep.subr.mxu0 0.0
        %393 = vmatpush1.msra.mxu0 0.0
        %394 = vmatprep.subr.mxu0 0.0
        %395 = vmatpush1.msra.mxu0 0.0
        %396 = vmatprep.subr.mxu0 0.0
        %397 = vmatpush1.msra.mxu0 0.0
        %398 = vmatprep.subr.mxu0 0.0
        %399 = vmatpush1.msra.mxu0 0.0
        %400 = vmatprep.subr.mxu0 0.0
        %401 = vmatpush1.msra.mxu0 0.0
        %402 = vmatprep.subr.mxu0 0.0
        %403 = vmatpush1.msra.mxu0 0.0
        %404 = vmatprep.subr.mxu0 0.0
        %405 = vmatpush1.msra.mxu0 0.0
        %406 = vmatprep.subr.mxu0 0.0
        %407 = vmatpush1.msra.mxu0 0.0
        %408 = vmatprep.subr.mxu0 0.0
        %409 = vmatpush1.msra.mxu0 0.0
        %410 = vmatprep.subr.mxu0 0.0
        %411 = vmatpush1.msra.mxu0 0.0
        %412 = vmatprep.subr.mxu0 0.0
        %413 = vmatpush1.msra.mxu0 0.0
        %414 = vmatprep.subr.mxu0 0.0
        %415 = vmatpush1.msra.mxu0 0.0
        %416 = vmatprep.subr.mxu0 0.0
        %417 = vmatpush1.msra.mxu0 0.0
        %418 = vmatprep.subr.mxu0 0.0
        %419 = vmatpush1.msra.mxu0 0.0
        %420 = vmatprep.subr.mxu0 0.0
        %421 = vmatpush1.msra.mxu0 0.0
        %422 = vmatprep.subr.mxu0 0.0
        %423 = vmatpush1.msra.mxu0 0.0
        %424 = vmatprep.subr.mxu0 0.0
        %425 = vmatpush1.msra.mxu0 0.0
        %426 = vmatprep.subr.mxu0 0.0
        %427 = vmatpush1.msra.mxu0 0.0
        %428 = vmatprep.subr.mxu0 0.0
        %429 = vmatpush1.msra.mxu0 0.0
        %430 = vmatprep.subr.mxu0 0.0
        %431 = vmatpush1.msra.mxu0 0.0
        %432 = vmatprep.subr.mxu0 0.0
        %433 = vmatpush1.msra.mxu0 0.0
        %434 = vmatprep.subr.mxu0 0.0
        %435 = vmatpush1.msra.mxu0 0.0
        %436 = vmatprep.subr.mxu0 0.0
        %437 = vmatpush1.msra.mxu0 0.0
        %438 = vmatprep.mubr.f32.mxu0 0.0
        %v439 = vand.u32 %v194, 4294901760
        %v440 = vsub.f32 %v194, %v439
        %441 = vmatmul.mubr.f32.gmra.mrb[0].mxu0 %v440
        %v442 = vpop.f32.mrb[0].mxu0
        %v443 = vadd.f32 %v363, %v442
        %v444 = vpop.f32.mrb[0].mxu0
        %445 = vdwg.mxu0
        %446 = vmatprep.subr.mxu0 0.0
        %v447 = vand.u32 %v185, 4294901760
        %448 = vmatpush1.msra.mxu0 %v447
        %449 = vmatprep.subr.mxu0 0.0
        %v450 = vand.u32 %v186, 4294901760
        %451 = vmatpush1.msra.mxu0 %v450
        %452 = vmatprep.subr.mxu0 0.0
        %v453 = vand.u32 %v187, 4294901760
        %454 = vmatpush1.msra.mxu0 %v453
        %455 = vmatprep.subr.mxu0 0.0
        %v456 = vand.u32 %v188, 4294901760
        %457 = vmatpush1.msra.mxu0 %v456
        %458 = vmatprep.subr.mxu0 0.0
        %459 = vmatpush1.msra.mxu0 0.0
        %460 = vmatprep.subr.mxu0 0.0
        %461 = vmatpush1.msra.mxu0 0.0
        %462 = vmatprep.subr.mxu0 0.0
        %463 = vmatpush1.msra.mxu0 0.0
        %464 = vmatprep.subr.mxu0 0.0
        %465 = vmatpush1.msra.mxu0 0.0
        %466 = vmatprep.subr.mxu0 0.0
        %467 = vmatpush1.msra.mxu0 0.0
        %468 = vmatprep.subr.mxu0 0.0
        %469 = vmatpush1.msra.mxu0 0.0
        %470 = vmatprep.subr.mxu0 0.0
        %471 = vmatpush1.msra.mxu0 0.0
        %472 = vmatprep.subr.mxu0 0.0
        %473 = vmatpush1.msra.mxu0 0.0
        %474 = vmatprep.subr.mxu0 0.0
        %475 = vmatpush1.msra.mxu0 0.0
        %476 = vmatprep.subr.mxu0 0.0
        %477 = vmatpush1.msra.mxu0 0.0
        %478 = vmatprep.subr.mxu0 0.0
        %479 = vmatpush1.msra.mxu0 0.0
        %480 = vmatprep.subr.mxu0 0.0
        %481 = vmatpush1.msra.mxu0 0.0
        %482 = vmatprep.subr.mxu0 0.0
        %483 = vmatpush1.msra.mxu0 0.0
        %484 = vmatprep.subr.mxu0 0.0
        %485 = vmatpush1.msra.mxu0 0.0
        %486 = vmatprep.subr.mxu0 0.0
        %487 = vmatpush1.msra.mxu0 0.0
        %488 = vmatprep.subr.mxu0 0.0
        %489 = vmatpush1.msra.mxu0 0.0
        %490 = vmatprep.subr.mxu0 0.0
        %491 = vmatpush1.msra.mxu0 0.0
        %492 = vmatprep.subr.mxu0 0.0
        %493 = vmatpush1.msra.mxu0 0.0
        %494 = vmatprep.subr.mxu0 0.0
        %495 = vmatpush1.msra.mxu0 0.0
        %496 = vmatprep.subr.mxu0 0.0
        %497 = vmatpush1.msra.mxu0 0.0
        %498 = vmatprep.subr.mxu0 0.0
        %499 = vmatpush1.msra.mxu0 0.0
        %500 = vmatprep.subr.mxu0 0.0
        %501 = vmatpush1.msra.mxu0 0.0
        %502 = vmatprep.subr.mxu0 0.0
        %503 = vmatpush1.msra.mxu0 0.0
        %504 = vmatprep.subr.mxu0 0.0
        %505 = vmatpush1.msra.mxu0 0.0
        %506 = vmatprep.subr.mxu0 0.0
        %507 = vmatpush1.msra.mxu0 0.0
        %508 = vmatprep.subr.mxu0 0.0
        %509 = vmatpush1.msra.mxu0 0.0
        %510 = vmatprep.subr.mxu0 0.0
        %511 = vmatpush1.msra.mxu0 0.0
        %512 = vmatprep.subr.mxu0 0.0
        %513 = vmatpush1.msra.mxu0 0.0
        %514 = vmatprep.mubr.f32.mxu0 0.0
        %v515 = vand.u32 %v194, 4294901760
        %v516 = vsub.f32 %v194, %v515
        %v517 = vand.u32 %v516, 4294901760
        %518 = vmatmul.mubr.f32.gmra.mrb[0].mxu0 %v517
        %v519 = vpop.f32.mrb[0].mxu0
        %v520 = vadd.f32 %v443, %v519
        %v521 = vpop.f32.mrb[0].mxu0
        %522 = vdwg.mxu0
        %523 = vmatprep.subr.mxu0 0.0
        %v524 = vand.u32 %v185, 4294901760
        %v525 = vsub.f32 %v185, %v524
        %v526 = vand.u32 %v525, 4294901760
        %527 = vmatpush1.msra.mxu0 %v526
        %528 = vmatprep.subr.mxu0 0.0
        %v529 = vand.u32 %v186, 4294901760
        %v530 = vsub.f32 %v186, %v529
        %v531 = vand.u32 %v530, 4294901760
        %532 = vmatpush1.msra.mxu0 %v531
        %533 = vmatprep.subr.mxu0 0.0
        %v534 = vand.u32 %v187, 4294901760
        %v535 = vsub.f32 %v187, %v534
        %v536 = vand.u32 %v535, 4294901760
        %537 = vmatpush1.msra.mxu0 %v536
        %538 = vmatprep.subr.mxu0 0.0
        %v539 = vand.u32 %v188, 4294901760
        %v540 = vsub.f32 %v188, %v539
        %v541 = vand.u32 %v540, 4294901760
        %542 = vmatpush1.msra.mxu0 %v541
        %543 = vmatprep.subr.mxu0 0.0
        %544 = vmatpush1.msra.mxu0 0.0
        %545 = vmatprep.subr.mxu0 0.0
        %546 = vmatpush1.msra.mxu0 0.0
        %547 = vmatprep.subr.mxu0 0.0
        %548 = vmatpush1.msra.mxu0 0.0
        %549 = vmatprep.subr.mxu0 0.0
        %550 = vmatpush1.msra.mxu0 0.0
        %551 = vmatprep.subr.mxu0 0.0
        %552 = vmatpush1.msra.mxu0 0.0
        %553 = vmatprep.subr.mxu0 0.0
        %554 = vmatpush1.msra.mxu0 0.0
        %555 = vmatprep.subr.mxu0 0.0
        %556 = vmatpush1.msra.mxu0 0.0
        %557 = vmatprep.subr.mxu0 0.0
        %558 = vmatpush1.msra.mxu0 0.0
        %559 = vmatprep.subr.mxu0 0.0
        %560 = vmatpush1.msra.mxu0 0.0
        %561 = vmatprep.subr.mxu0 0.0
        %562 = vmatpush1.msra.mxu0 0.0
        %563 = vmatprep.subr.mxu0 0.0
        %564 = vmatpush1.msra.mxu0 0.0
        %565 = vmatprep.subr.mxu0 0.0
        %566 = vmatpush1.msra.mxu0 0.0
        %567 = vmatprep.subr.mxu0 0.0
        %568 = vmatpush1.msra.mxu0 0.0
        %569 = vmatprep.subr.mxu0 0.0
        %570 = vmatpush1.msra.mxu0 0.0
        %571 = vmatprep.subr.mxu0 0.0
        %572 = vmatpush1.msra.mxu0 0.0
        %573 = vmatprep.subr.mxu0 0.0
        %574 = vmatpush1.msra.mxu0 0.0
        %575 = vmatprep.subr.mxu0 0.0
        %576 = vmatpush1.msra.mxu0 0.0
        %577 = vmatprep.subr.mxu0 0.0
        %578 = vmatpush1.msra.mxu0 0.0
        %579 = vmatprep.subr.mxu0 0.0
        %580 = vmatpush1.msra.mxu0 0.0
        %581 = vmatprep.subr.mxu0 0.0
        %582 = vmatpush1.msra.mxu0 0.0
        %583 = vmatprep.subr.mxu0 0.0
        %584 = vmatpush1.msra.mxu0 0.0
        %585 = vmatprep.subr.mxu0 0.0
        %586 = vmatpush1.msra.mxu0 0.0
        %587 = vmatprep.subr.mxu0 0.0
        %588 = vmatpush1.msra.mxu0 0.0
        %589 = vmatprep.subr.mxu0 0.0
        %590 = vmatpush1.msra.mxu0 0.0
        %591 = vmatprep.subr.mxu0 0.0
        %592 = vmatpush1.msra.mxu0 0.0
        %593 = vmatprep.subr.mxu0 0.0
        %594 = vmatpush1.msra.mxu0 0.0
        %595 = vmatprep.subr.mxu0 0.0
        %596 = vmatpush1.msra.mxu0 0.0
        %597 = vmatprep.subr.mxu0 0.0
        %598 = vmatpush1.msra.mxu0 0.0
        %599 = vmatprep.mubr.f32.mxu0 0.0
        %v600 = vand.u32 %v194, 4294901760
        %601 = vmatmul.mubr.f32.gmra.mrb[0].mxu0 %v600
        %v602 = vpop.f32.mrb[0].mxu0
        %v603 = vadd.f32 %v520, %v602
        %v604 = vpop.f32.mrb[0].mxu0
        %605 = vdwg.mxu0
        %606 = vmatprep.subr.mxu0 0.0
        %v607 = vand.u32 %v185, 4294901760
        %608 = vmatpush1.msra.mxu0 %v607
        %609 = vmatprep.subr.mxu0 0.0
        %v610 = vand.u32 %v186, 4294901760
        %611 = vmatpush1.msra.mxu0 %v610
        %612 = vmatprep.subr.mxu0 0.0
        %v613 = vand.u32 %v187, 4294901760
        %614 = vmatpush1.msra.mxu0 %v613
        %615 = vmatprep.subr.mxu0 0.0
        %v616 = vand.u32 %v188, 4294901760
        %617 = vmatpush1.msra.mxu0 %v616
        %618 = vmatprep.subr.mxu0 0.0
        %619 = vmatpush1.msra.mxu0 0.0
        %620 = vmatprep.subr.mxu0 0.0
        %621 = vmatpush1.msra.mxu0 0.0
        %622 = vmatprep.subr.mxu0 0.0
        %623 = vmatpush1.msra.mxu0 0.0
        %624 = vmatprep.subr.mxu0 0.0
        %625 = vmatpush1.msra.mxu0 0.0
        %626 = vmatprep.subr.mxu0 0.0
        %627 = vmatpush1.msra.mxu0 0.0
        %628 = vmatprep.subr.mxu0 0.0
        %629 = vmatpush1.msra.mxu0 0.0
        %630 = vmatprep.subr.mxu0 0.0
        %631 = vmatpush1.msra.mxu0 0.0
        %632 = vmatprep.subr.mxu0 0.0
        %633 = vmatpush1.msra.mxu0 0.0
        %634 = vmatprep.subr.mxu0 0.0
        %635 = vmatpush1.msra.mxu0 0.0
        %636 = vmatprep.subr.mxu0 0.0
        %637 = vmatpush1.msra.mxu0 0.0
        %638 = vmatprep.subr.mxu0 0.0
        %639 = vmatpush1.msra.mxu0 0.0
        %640 = vmatprep.subr.mxu0 0.0
        %641 = vmatpush1.msra.mxu0 0.0
        %642 = vmatprep.subr.mxu0 0.0
        %643 = vmatpush1.msra.mxu0 0.0
        %644 = vmatprep.subr.mxu0 0.0
        %645 = vmatpush1.msra.mxu0 0.0
        %646 = vmatprep.subr.mxu0 0.0
        %647 = vmatpush1.msra.mxu0 0.0
        %648 = vmatprep.subr.mxu0 0.0
        %649 = vmatpush1.msra.mxu0 0.0
        %650 = vmatprep.subr.mxu0 0.0
        %651 = vmatpush1.msra.mxu0 0.0
        %652 = vmatprep.subr.mxu0 0.0
        %653 = vmatpush1.msra.mxu0 0.0
        %654 = vmatprep.subr.mxu0 0.0
        %655 = vmatpush1.msra.mxu0 0.0
        %656 = vmatprep.subr.mxu0 0.0
        %657 = vmatpush1.msra.mxu0 0.0
        %658 = vmatprep.subr.mxu0 0.0
        %659 = vmatpush1.msra.mxu0 0.0
        %660 = vmatprep.subr.mxu0 0.0
        %661 = vmatpush1.msra.mxu0 0.0
        %662 = vmatprep.subr.mxu0 0.0
        %663 = vmatpush1.msra.mxu0 0.0
        %664 = vmatprep.subr.mxu0 0.0
        %665 = vmatpush1.msra.mxu0 0.0
        %666 = vmatprep.subr.mxu0 0.0
        %667 = vmatpush1.msra.mxu0 0.0
        %668 = vmatprep.subr.mxu0 0.0
        %669 = vmatpush1.msra.mxu0 0.0
        %670 = vmatprep.subr.mxu0 0.0
        %671 = vmatpush1.msra.mxu0 0.0
        %672 = vmatprep.subr.mxu0 0.0
        %673 = vmatpush1.msra.mxu0 0.0
        %674 = vmatprep.mubr.f32.mxu0 0.0
        %v675 = vand.u32 %v194, 4294901760
        %676 = vmatmul.mubr.f32.gmra.mrb[0].mxu0 %v675
        %v677 = vpop.f32.mrb[0].mxu0
        %v678 = vadd.f32 %v603, %v677
        %v679 = vpop.f32.mrb[0].mxu0
        %680 = vdwg.mxu0
        %v682 = vsel %vm192, %v189, 0
        %684 = vmatprep.subr.mxu0 0.0
        %v685 = vand.u32 %v185, 4294901760
        %686 = vmatpush1.msra.mxu0 %v685
        %687 = vmatprep.subr.mxu0 0.0
        %v688 = vand.u32 %v186, 4294901760
        %689 = vmatpush1.msra.mxu0 %v688
        %690 = vmatprep.subr.mxu0 0.0
        %v691 = vand.u32 %v187, 4294901760
        %692 = vmatpush1.msra.mxu0 %v691
        %693 = vmatprep.subr.mxu0 0.0
        %v694 = vand.u32 %v188, 4294901760
        %695 = vmatpush1.msra.mxu0 %v694
        %696 = vmatprep.subr.mxu0 0.0
        %697 = vmatpush1.msra.mxu0 0.0
        %698 = vmatprep.subr.mxu0 0.0
        %699 = vmatpush1.msra.mxu0 0.0
        %700 = vmatprep.subr.mxu0 0.0
        %701 = vmatpush1.msra.mxu0 0.0
        %702 = vmatprep.subr.mxu0 0.0
        %703 = vmatpush1.msra.mxu0 0.0
        %704 = vmatprep.subr.mxu0 0.0
        %705 = vmatpush1.msra.mxu0 0.0
        %706 = vmatprep.subr.mxu0 0.0
        %707 = vmatpush1.msra.mxu0 0.0
        %708 = vmatprep.subr.mxu0 0.0
        %709 = vmatpush1.msra.mxu0 0.0
        %710 = vmatprep.subr.mxu0 0.0
        %711 = vmatpush1.msra.mxu0 0.0
        %712 = vmatprep.subr.mxu0 0.0
        %713 = vmatpush1.msra.mxu0 0.0
        %714 = vmatprep.subr.mxu0 0.0
        %715 = vmatpush1.msra.mxu0 0.0
        %716 = vmatprep.subr.mxu0 0.0
        %717 = vmatpush1.msra.mxu0 0.0
        %718 = vmatprep.subr.mxu0 0.0
        %719 = vmatpush1.msra.mxu0 0.0
        %720 = vmatprep.subr.mxu0 0.0
        %721 = vmatpush1.msra.mxu0 0.0
        %722 = vmatprep.subr.mxu0 0.0
        %723 = vmatpush1.msra.mxu0 0.0
        %724 = vmatprep.subr.mxu0 0.0
        %725 = vmatpush1.msra.mxu0 0.0
        %726 = vmatprep.subr.mxu0 0.0
        %727 = vmatpush1.msra.mxu0 0.0
        %728 = vmatprep.subr.mxu0 0.0
        %729 = vmatpush1.msra.mxu0 0.0
        %730 = vmatprep.subr.mxu0 0.0
        %731 = vmatpush1.msra.mxu0 0.0
        %732 = vmatprep.subr.mxu0 0.0
        %733 = vmatpush1.msra.mxu0 0.0
        %734 = vmatprep.subr.mxu0 0.0
        %735 = vmatpush1.msra.mxu0 0.0
        %736 = vmatprep.subr.mxu0 0.0
        %737 = vmatpush1.msra.mxu0 0.0
        %738 = vmatprep.subr.mxu0 0.0
        %739 = vmatpush1.msra.mxu0 0.0
        %740 = vmatprep.subr.mxu0 0.0
        %741 = vmatpush1.msra.mxu0 0.0
        %742 = vmatprep.subr.mxu0 0.0
        %743 = vmatpush1.msra.mxu0 0.0
        %744 = vmatprep.subr.mxu0 0.0
        %745 = vmatpush1.msra.mxu0 0.0
        %746 = vmatprep.subr.mxu0 0.0
        %747 = vmatpush1.msra.mxu0 0.0
        %748 = vmatprep.subr.mxu0 0.0
        %749 = vmatpush1.msra.mxu0 0.0
        %750 = vmatprep.subr.mxu0 0.0
        %751 = vmatpush1.msra.mxu0 0.0
        %752 = vmatprep.mubr.f32.mxu0 0.0
        %v753 = vand.u32 %v682, 4294901760
        %v754 = vsub.f32 %v682, %v753
        %v755 = vand.u32 %v754, 4294901760
        %v756 = vsub.f32 %v754, %v755
        %v757 = vand.u32 %v756, 4294901760
        %758 = vmatmul.mubr.f32.gmra.mrb[0].mxu0 %v757
        %v759 = vpop.f32.mrb[0].mxu0
        %v760 = vadd.f32 %v678, %v759
        %v761 = vpop.f32.mrb[0].mxu0
        %762 = vdwg.mxu0
        %763 = vmatprep.subr.mxu0 0.0
        %v764 = vand.u32 %v185, 4294901760
        %v765 = vsub.f32 %v185, %v764
        %v766 = vand.u32 %v765, 4294901760
        %v767 = vsub.f32 %v765, %v766
        %v768 = vand.u32 %v767, 4294901760
        %769 = vmatpush1.msra.mxu0 %v768
        %770 = vmatprep.subr.mxu0 0.0
        %v771 = vand.u32 %v186, 4294901760
        %v772 = vsub.f32 %v186, %v771
        %v773 = vand.u32 %v772, 4294901760
        %v774 = vsub.f32 %v772, %v773
        %v775 = vand.u32 %v774, 4294901760
        %776 = vmatpush1.msra.mxu0 %v775
        %777 = vmatprep.subr.mxu0 0.0
        %v778 = vand.u32 %v187, 4294901760
        %v779 = vsub.f32 %v187, %v778
        %v780 = vand.u32 %v779, 4294901760
        %v781 = vsub.f32 %v779, %v780
        %v782 = vand.u32 %v781, 4294901760
        %783 = vmatpush1.msra.mxu0 %v782
        %784 = vmatprep.subr.mxu0 0.0
        %v785 = vand.u32 %v188, 4294901760
        %v786 = vsub.f32 %v188, %v785
        %v787 = vand.u32 %v786, 4294901760
        %v788 = vsub.f32 %v786, %v787
        %v789 = vand.u32 %v788, 4294901760
        %790 = vmatpush1.msra.mxu0 %v789
        %791 = vmatprep.subr.mxu0 0.0
        %792 = vmatpush1.msra.mxu0 0.0
        %793 = vmatprep.subr.mxu0 0.0
        %794 = vmatpush1.msra.mxu0 0.0
        %795 = vmatprep.subr.mxu0 0.0
        %796 = vmatpush1.msra.mxu0 0.0
        %797 = vmatprep.subr.mxu0 0.0
        %798 = vmatpush1.msra.mxu0 0.0
        %799 = vmatprep.subr.mxu0 0.0
        %800 = vmatpush1.msra.mxu0 0.0
        %801 = vmatprep.subr.mxu0 0.0
        %802 = vmatpush1.msra.mxu0 0.0
        %803 = vmatprep.subr.mxu0 0.0
        %804 = vmatpush1.msra.mxu0 0.0
        %805 = vmatprep.subr.mxu0 0.0
        %806 = vmatpush1.msra.mxu0 0.0
        %807 = vmatprep.subr.mxu0 0.0
        %808 = vmatpush1.msra.mxu0 0.0
        %809 = vmatprep.subr.mxu0 0.0
        %810 = vmatpush1.msra.mxu0 0.0
        %811 = vmatprep.subr.mxu0 0.0
        %812 = vmatpush1.msra.mxu0 0.0
        %813 = vmatprep.subr.mxu0 0.0
        %814 = vmatpush1.msra.mxu0 0.0
        %815 = vmatprep.subr.mxu0 0.0
        %816 = vmatpush1.msra.mxu0 0.0
        %817 = vmatprep.subr.mxu0 0.0
        %818 = vmatpush1.msra.mxu0 0.0
        %819 = vmatprep.subr.mxu0 0.0
        %820 = vmatpush1.msra.mxu0 0.0
        %821 = vmatprep.subr.mxu0 0.0
        %822 = vmatpush1.msra.mxu0 0.0
        %823 = vmatprep.subr.mxu0 0.0
        %824 = vmatpush1.msra.mxu0 0.0
        %825 = vmatprep.subr.mxu0 0.0
        %826 = vmatpush1.msra.mxu0 0.0
        %827 = vmatprep.subr.mxu0 0.0
        %828 = vmatpush1.msra.mxu0 0.0
        %829 = vmatprep.subr.mxu0 0.0
        %830 = vmatpush1.msra.mxu0 0.0
        %831 = vmatprep.subr.mxu0 0.0
        %832 = vmatpush1.msra.mxu0 0.0
        %833 = vmatprep.subr.mxu0 0.0
        %834 = vmatpush1.msra.mxu0 0.0
        %835 = vmatprep.subr.mxu0 0.0
        %836 = vmatpush1.msra.mxu0 0.0
        %837 = vmatprep.subr.mxu0 0.0
        %838 = vmatpush1.msra.mxu0 0.0
        %839 = vmatprep.subr.mxu0 0.0
        %840 = vmatpush1.msra.mxu0 0.0
        %841 = vmatprep.subr.mxu0 0.0
        %842 = vmatpush1.msra.mxu0 0.0
        %843 = vmatprep.subr.mxu0 0.0
        %844 = vmatpush1.msra.mxu0 0.0
        %845 = vmatprep.subr.mxu0 0.0
        %846 = vmatpush1.msra.mxu0 0.0
        %847 = vmatprep.mubr.f32.mxu0 0.0
        %v848 = vand.u32 %v682, 4294901760
        %849 = vmatmul.mubr.f32.gmra.mrb[0].mxu0 %v848
        %v850 = vpop.f32.mrb[0].mxu0
        %v851 = vadd.f32 %v760, %v850
        %v852 = vpop.f32.mrb[0].mxu0
        %853 = vdwg.mxu0
        %854 = vmatprep.subr.mxu0 0.0
        %v855 = vand.u32 %v185, 4294901760
        %v856 = vsub.f32 %v185, %v855
        %857 = vmatpush1.msra.mxu0 %v856
        %858 = vmatprep.subr.mxu0 0.0
        %v859 = vand.u32 %v186, 4294901760
        %v860 = vsub.f32 %v186, %v859
        %861 = vmatpush1.msra.mxu0 %v860
        %862 = vmatprep.subr.mxu0 0.0
        %v863 = vand.u32 %v187, 4294901760
        %v864 = vsub.f32 %v187, %v863
        %865 = vmatpush1.msra.mxu0 %v864
        %866 = vmatprep.subr.mxu0 0.0
        %v867 = vand.u32 %v188, 4294901760
        %v868 = vsub.f32 %v188, %v867
        %869 = vmatpush1.msra.mxu0 %v868
        %870 = vmatprep.subr.mxu0 0.0
        %871 = vmatpush1.msra.mxu0 0.0
        %872 = vmatprep.subr.mxu0 0.0
        %873 = vmatpush1.msra.mxu0 0.0
        %874 = vmatprep.subr.mxu0 0.0
        %875 = vmatpush1.msra.mxu0 0.0
        %876 = vmatprep.subr.mxu0 0.0
        %877 = vmatpush1.msra.mxu0 0.0
        %878 = vmatprep.subr.mxu0 0.0
        %879 = vmatpush1.msra.mxu0 0.0
        %880 = vmatprep.subr.mxu0 0.0
        %881 = vmatpush1.msra.mxu0 0.0
        %882 = vmatprep.subr.mxu0 0.0
        %883 = vmatpush1.msra.mxu0 0.0
        %884 = vmatprep.subr.mxu0 0.0
        %885 = vmatpush1.msra.mxu0 0.0
        %886 = vmatprep.subr.mxu0 0.0
        %887 = vmatpush1.msra.mxu0 0.0
        %888 = vmatprep.subr.mxu0 0.0
        %889 = vmatpush1.msra.mxu0 0.0
        %890 = vmatprep.subr.mxu0 0.0
        %891 = vmatpush1.msra.mxu0 0.0
        %892 = vmatprep.subr.mxu0 0.0
        %893 = vmatpush1.msra.mxu0 0.0
        %894 = vmatprep.subr.mxu0 0.0
        %895 = vmatpush1.msra.mxu0 0.0
        %896 = vmatprep.subr.mxu0 0.0
        %897 = vmatpush1.msra.mxu0 0.0
        %898 = vmatprep.subr.mxu0 0.0
        %899 = vmatpush1.msra.mxu0 0.0
        %900 = vmatprep.subr.mxu0 0.0
        %901 = vmatpush1.msra.mxu0 0.0
        %902 = vmatprep.subr.mxu0 0.0
        %903 = vmatpush1.msra.mxu0 0.0
        %904 = vmatprep.subr.mxu0 0.0
        %905 = vmatpush1.msra.mxu0 0.0
        %906 = vmatprep.subr.mxu0 0.0
        %907 = vmatpush1.msra.mxu0 0.0
        %908 = vmatprep.subr.mxu0 0.0
        %909 = vmatpush1.msra.mxu0 0.0
        %910 = vmatprep.subr.mxu0 0.0
        %911 = vmatpush1.msra.mxu0 0.0
        %912 = vmatprep.subr.mxu0 0.0
        %913 = vmatpush1.msra.mxu0 0.0
        %914 = vmatprep.subr.mxu0 0.0
        %915 = vmatpush1.msra.mxu0 0.0
        %916 = vmatprep.subr.mxu0 0.0
        %917 = vmatpush1.msra.mxu0 0.0
        %918 = vmatprep.subr.mxu0 0.0
        %919 = vmatpush1.msra.mxu0 0.0
        %920 = vmatprep.subr.mxu0 0.0
        %921 = vmatpush1.msra.mxu0 0.0
        %922 = vmatprep.subr.mxu0 0.0
        %923 = vmatpush1.msra.mxu0 0.0
        %924 = vmatprep.subr.mxu0 0.0
        %925 = vmatpush1.msra.mxu0 0.0
        %926 = vmatprep.mubr.f32.mxu0 0.0
        %v927 = vand.u32 %v682, 4294901760
        %v928 = vsub.f32 %v682, %v927
        %929 = vmatmul.mubr.f32.gmra.mrb[0].mxu0 %v928
        %v930 = vpop.f32.mrb[0].mxu0
        %v931 = vadd.f32 %v851, %v930
        %v932 = vpop.f32.mrb[0].mxu0
        %933 = vdwg.mxu0
        %934 = vmatprep.subr.mxu0 0.0
        %v935 = vand.u32 %v185, 4294901760
        %936 = vmatpush1.msra.mxu0 %v935
        %937 = vmatprep.subr.mxu0 0.0
        %v938 = vand.u32 %v186, 4294901760
        %939 = vmatpush1.msra.mxu0 %v938
        %940 = vmatprep.subr.mxu0 0.0
        %v941 = vand.u32 %v187, 4294901760
        %942 = vmatpush1.msra.mxu0 %v941
        %943 = vmatprep.subr.mxu0 0.0
        %v944 = vand.u32 %v188, 4294901760
        %945 = vmatpush1.msra.mxu0 %v944
        %946 = vmatprep.subr.mxu0 0.0
        %947 = vmatpush1.msra.mxu0 0.0
        %948 = vmatprep.subr.mxu0 0.0
        %949 = vmatpush1.msra.mxu0 0.0
        %950 = vmatprep.subr.mxu0 0.0
        %951 = vmatpush1.msra.mxu0 0.0
        %952 = vmatprep.subr.mxu0 0.0
        %953 = vmatpush1.msra.mxu0 0.0
        %954 = vmatprep.subr.mxu0 0.0
        %955 = vmatpush1.msra.mxu0 0.0
        %956 = vmatprep.subr.mxu0 0.0
        %957 = vmatpush1.msra.mxu0 0.0
        %958 = vmatprep.subr.mxu0 0.0
        %959 = vmatpush1.msra.mxu0 0.0
        %960 = vmatprep.subr.mxu0 0.0
        %961 = vmatpush1.msra.mxu0 0.0
        %962 = vmatprep.subr.mxu0 0.0
        %963 = vmatpush1.msra.mxu0 0.0
        %964 = vmatprep.subr.mxu0 0.0
        %965 = vmatpush1.msra.mxu0 0.0
        %966 = vmatprep.subr.mxu0 0.0
        %967 = vmatpush1.msra.mxu0 0.0
        %968 = vmatprep.subr.mxu0 0.0
        %969 = vmatpush1.msra.mxu0 0.0
        %970 = vmatprep.subr.mxu0 0.0
        %971 = vmatpush1.msra.mxu0 0.0
        %972 = vmatprep.subr.mxu0 0.0
        %973 = vmatpush1.msra.mxu0 0.0
        %974 = vmatprep.subr.mxu0 0.0
        %975 = vmatpush1.msra.mxu0 0.0
        %976 = vmatprep.subr.mxu0 0.0
        %977 = vmatpush1.msra.mxu0 0.0
        %978 = vmatprep.subr.mxu0 0.0
        %979 = vmatpush1.msra.mxu0 0.0
        %980 = vmatprep.subr.mxu0 0.0
        %981 = vmatpush1.msra.mxu0 0.0
        %982 = vmatprep.subr.mxu0 0.0
        %983 = vmatpush1.msra.mxu0 0.0
        %984 = vmatprep.subr.mxu0 0.0
        %985 = vmatpush1.msra.mxu0 0.0
        %986 = vmatprep.subr.mxu0 0.0
        %987 = vmatpush1.msra.mxu0 0.0
        %988 = vmatprep.subr.mxu0 0.0
        %989 = vmatpush1.msra.mxu0 0.0
        %990 = vmatprep.subr.mxu0 0.0
        %991 = vmatpush1.msra.mxu0 0.0
        %992 = vmatprep.subr.mxu0 0.0
        %993 = vmatpush1.msra.mxu0 0.0
        %994 = vmatprep.subr.mxu0 0.0
        %995 = vmatpush1.msra.mxu0 0.0
        %996 = vmatprep.subr.mxu0 0.0
        %997 = vmatpush1.msra.mxu0 0.0
        %998 = vmatprep.subr.mxu0 0.0
        %999 = vmatpush1.msra.mxu0 0.0
        %1000 = vmatprep.subr.mxu0 0.0
        %1001 = vmatpush1.msra.mxu0 0.0
        %1002 = vmatprep.mubr.f32.mxu0 0.0
        %v1003 = vand.u32 %v682, 4294901760
        %v1004 = vsub.f32 %v682, %v1003
        %v1005 = vand.u32 %v1004, 4294901760
        %1006 = vmatmul.mubr.f32.gmra.mrb[0].mxu0 %v1005
        %v1007 = vpop.f32.mrb[0].mxu0
        %v1008 = vadd.f32 %v931, %v1007
        %v1009 = vpop.f32.mrb[0].mxu0
        %1010 = vdwg.mxu0
        %1011 = vmatprep.subr.mxu0 0.0
        %v1012 = vand.u32 %v185, 4294901760
        %v1013 = vsub.f32 %v185, %v1012
        %v1014 = vand.u32 %v1013, 4294901760
        %1015 = vmatpush1.msra.mxu0 %v1014
        %1016 = vmatprep.subr.mxu0 0.0
        %v1017 = vand.u32 %v186, 4294901760
        %v1018 = vsub.f32 %v186, %v1017
        %v1019 = vand.u32 %v1018, 4294901760
        %1020 = vmatpush1.msra.mxu0 %v1019
        %1021 = vmatprep.subr.mxu0 0.0
        %v1022 = vand.u32 %v187, 4294901760
        %v1023 = vsub.f32 %v187, %v1022
        %v1024 = vand.u32 %v1023, 4294901760
        %1025 = vmatpush1.msra.mxu0 %v1024
        %1026 = vmatprep.subr.mxu0 0.0
        %v1027 = vand.u32 %v188, 4294901760
        %v1028 = vsub.f32 %v188, %v1027
        %v1029 = vand.u32 %v1028, 4294901760
        %1030 = vmatpush1.msra.mxu0 %v1029
        %1031 = vmatprep.subr.mxu0 0.0
        %1032 = vmatpush1.msra.mxu0 0.0
        %1033 = vmatprep.subr.mxu0 0.0
        %1034 = vmatpush1.msra.mxu0 0.0
        %1035 = vmatprep.subr.mxu0 0.0
        %1036 = vmatpush1.msra.mxu0 0.0
        %1037 = vmatprep.subr.mxu0 0.0
        %1038 = vmatpush1.msra.mxu0 0.0
        %1039 = vmatprep.subr.mxu0 0.0
        %1040 = vmatpush1.msra.mxu0 0.0
        %1041 = vmatprep.subr.mxu0 0.0
        %1042 = vmatpush1.msra.mxu0 0.0
        %1043 = vmatprep.subr.mxu0 0.0
        %1044 = vmatpush1.msra.mxu0 0.0
        %1045 = vmatprep.subr.mxu0 0.0
        %1046 = vmatpush1.msra.mxu0 0.0
        %1047 = vmatprep.subr.mxu0 0.0
        %1048 = vmatpush1.msra.mxu0 0.0
        %1049 = vmatprep.subr.mxu0 0.0
        %1050 = vmatpush1.msra.mxu0 0.0
        %1051 = vmatprep.subr.mxu0 0.0
        %1052 = vmatpush1.msra.mxu0 0.0
        %1053 = vmatprep.subr.mxu0 0.0
        %1054 = vmatpush1.msra.mxu0 0.0
        %1055 = vmatprep.subr.mxu0 0.0
        %1056 = vmatpush1.msra.mxu0 0.0
        %1057 = vmatprep.subr.mxu0 0.0
        %1058 = vmatpush1.msra.mxu0 0.0
        %1059 = vmatprep.subr.mxu0 0.0
        %1060 = vmatpush1.msra.mxu0 0.0
        %1061 = vmatprep.subr.mxu0 0.0
        %1062 = vmatpush1.msra.mxu0 0.0
        %1063 = vmatprep.subr.mxu0 0.0
        %1064 = vmatpush1.msra.mxu0 0.0
        %1065 = vmatprep.subr.mxu0 0.0
        %1066 = vmatpush1.msra.mxu0 0.0
        %1067 = vmatprep.subr.mxu0 0.0
        %1068 = vmatpush1.msra.mxu0 0.0
        %1069 = vmatprep.subr.mxu0 0.0
        %1070 = vmatpush1.msra.mxu0 0.0
        %1071 = vmatprep.subr.mxu0 0.0
        %1072 = vmatpush1.msra.mxu0 0.0
        %1073 = vmatprep.subr.mxu0 0.0
        %1074 = vmatpush1.msra.mxu0 0.0
        %1075 = vmatprep.subr.mxu0 0.0
        %1076 = vmatpush1.msra.mxu0 0.0
        %1077 = vmatprep.subr.mxu0 0.0
        %1078 = vmatpush1.msra.mxu0 0.0
        %1079 = vmatprep.subr.mxu0 0.0
        %1080 = vmatpush1.msra.mxu0 0.0
        %1081 = vmatprep.subr.mxu0 0.0
        %1082 = vmatpush1.msra.mxu0 0.0
        %1083 = vmatprep.subr.mxu0 0.0
        %1084 = vmatpush1.msra.mxu0 0.0
        %1085 = vmatprep.subr.mxu0 0.0
        %1086 = vmatpush1.msra.mxu0 0.0
        %1087 = vmatprep.mubr.f32.mxu0 0.0
        %v1088 = vand.u32 %v682, 4294901760
        %1089 = vmatmul.mubr.f32.gmra.mrb[0].mxu0 %v1088
        %v1090 = vpop.f32.mrb[0].mxu0
        %v1091 = vadd.f32 %v1008, %v1090
        %v1092 = vpop.f32.mrb[0].mxu0
        %1093 = vdwg.mxu0
        %1094 = vmatprep.subr.mxu0 0.0
        %v1095 = vand.u32 %v185, 4294901760
        %1096 = vmatpush1.msra.mxu0 %v1095
        %1097 = vmatprep.subr.mxu0 0.0
        %v1098 = vand.u32 %v186, 4294901760
        %1099 = vmatpush1.msra.mxu0 %v1098
        %1100 = vmatprep.subr.mxu0 0.0
        %v1101 = vand.u32 %v187, 4294901760
        %1102 = vmatpush1.msra.mxu0 %v1101
        %1103 = vmatprep.subr.mxu0 0.0
        %v1104 = vand.u32 %v188, 4294901760
        %1105 = vmatpush1.msra.mxu0 %v1104
        %1106 = vmatprep.subr.mxu0 0.0
        %1107 = vmatpush1.msra.mxu0 0.0
        %1108 = vmatprep.subr.mxu0 0.0
        %1109 = vmatpush1.msra.mxu0 0.0
        %1110 = vmatprep.subr.mxu0 0.0
        %1111 = vmatpush1.msra.mxu0 0.0
        %1112 = vmatprep.subr.mxu0 0.0
        %1113 = vmatpush1.msra.mxu0 0.0
        %1114 = vmatprep.subr.mxu0 0.0
        %1115 = vmatpush1.msra.mxu0 0.0
        %1116 = vmatprep.subr.mxu0 0.0
        %1117 = vmatpush1.msra.mxu0 0.0
        %1118 = vmatprep.subr.mxu0 0.0
        %1119 = vmatpush1.msra.mxu0 0.0
        %1120 = vmatprep.subr.mxu0 0.0
        %1121 = vmatpush1.msra.mxu0 0.0
        %1122 = vmatprep.subr.mxu0 0.0
        %1123 = vmatpush1.msra.mxu0 0.0
        %1124 = vmatprep.subr.mxu0 0.0
        %1125 = vmatpush1.msra.mxu0 0.0
        %1126 = vmatprep.subr.mxu0 0.0
        %1127 = vmatpush1.msra.mxu0 0.0
        %1128 = vmatprep.subr.mxu0 0.0
        %1129 = vmatpush1.msra.mxu0 0.0
        %1130 = vmatprep.subr.mxu0 0.0
        %1131 = vmatpush1.msra.mxu0 0.0
        %1132 = vmatprep.subr.mxu0 0.0
        %1133 = vmatpush1.msra.mxu0 0.0
        %1134 = vmatprep.subr.mxu0 0.0
        %1135 = vmatpush1.msra.mxu0 0.0
        %1136 = vmatprep.subr.mxu0 0.0
        %1137 = vmatpush1.msra.mxu0 0.0
        %1138 = vmatprep.subr.mxu0 0.0
        %1139 = vmatpush1.msra.mxu0 0.0
        %1140 = vmatprep.subr.mxu0 0.0
        %1141 = vmatpush1.msra.mxu0 0.0
        %1142 = vmatprep.subr.mxu0 0.0
        %1143 = vmatpush1.msra.mxu0 0.0
        %1144 = vmatprep.subr.mxu0 0.0
        %1145 = vmatpush1.msra.mxu0 0.0
        %1146 = vmatprep.subr.mxu0 0.0
        %1147 = vmatpush1.msra.mxu0 0.0
        %1148 = vmatprep.subr.mxu0 0.0
        %1149 = vmatpush1.msra.mxu0 0.0
        %1150 = vmatprep.subr.mxu0 0.0
        %1151 = vmatpush1.msra.mxu0 0.0
        %1152 = vmatprep.subr.mxu0 0.0
        %1153 = vmatpush1.msra.mxu0 0.0
        %1154 = vmatprep.subr.mxu0 0.0
        %1155 = vmatpush1.msra.mxu0 0.0
        %1156 = vmatprep.subr.mxu0 0.0
        %1157 = vmatpush1.msra.mxu0 0.0
        %1158 = vmatprep.subr.mxu0 0.0
        %1159 = vmatpush1.msra.mxu0 0.0
        %1160 = vmatprep.subr.mxu0 0.0
        %1161 = vmatpush1.msra.mxu0 0.0
        %1162 = vmatprep.mubr.f32.mxu0 0.0
        %v1163 = vand.u32 %v682, 4294901760
        %1164 = vmatmul.mubr.f32.gmra.mrb[0].mxu0 %v1163
        %v1165 = vpop.f32.mrb[0].mxu0
        %v1166 = vadd.f32 %v1091, %v1165
        %v1167 = vpop.f32.mrb[0].mxu0
        %1168 = vdwg.mxu0
        %s1169 = scalar_lea.vmem %s155, 16 [#allocation2]
        %v1170 = vld [vmem:[%s1169] sm:$0xff]
        %v1172 = vsel %vm192, %v1170, 0
        %1174 = vmatprep.subr.mxu0 0.0
        %v1175 = vand.u32 %v185, 4294901760
        %1176 = vmatpush1.msra.mxu0 %v1175
        %1177 = vmatprep.subr.mxu0 0.0
        %v1178 = vand.u32 %v186, 4294901760
        %1179 = vmatpush1.msra.mxu0 %v1178
        %1180 = vmatprep.subr.mxu0 0.0
        %v1181 = vand.u32 %v187, 4294901760
        %1182 = vmatpush1.msra.mxu0 %v1181
        %1183 = vmatprep.subr.mxu0 0.0
        %v1184 = vand.u32 %v188, 4294901760
        %1185 = vmatpush1.msra.mxu0 %v1184
        %1186 = vmatprep.subr.mxu0 0.0
        %1187 = vmatpush1.msra.mxu0 0.0
        %1188 = vmatprep.subr.mxu0 0.0
        %1189 = vmatpush1.msra.mxu0 0.0
        %1190 = vmatprep.subr.mxu0 0.0
        %1191 = vmatpush1.msra.mxu0 0.0
        %1192 = vmatprep.subr.mxu0 0.0
        %1193 = vmatpush1.msra.mxu0 0.0
        %1194 = vmatprep.subr.mxu0 0.0
        %1195 = vmatpush1.msra.mxu0 0.0
        %1196 = vmatprep.subr.mxu0 0.0
        %1197 = vmatpush1.msra.mxu0 0.0
        %1198 = vmatprep.subr.mxu0 0.0
        %1199 = vmatpush1.msra.mxu0 0.0
        %1200 = vmatprep.subr.mxu0 0.0
        %1201 = vmatpush1.msra.mxu0 0.0
        %1202 = vmatprep.subr.mxu0 0.0
        %1203 = vmatpush1.msra.mxu0 0.0
        %1204 = vmatprep.subr.mxu0 0.0
        %1205 = vmatpush1.msra.mxu0 0.0
        %1206 = vmatprep.subr.mxu0 0.0
        %1207 = vmatpush1.msra.mxu0 0.0
        %1208 = vmatprep.subr.mxu0 0.0
        %1209 = vmatpush1.msra.mxu0 0.0
        %1210 = vmatprep.subr.mxu0 0.0
        %1211 = vmatpush1.msra.mxu0 0.0
        %1212 = vmatprep.subr.mxu0 0.0
        %1213 = vmatpush1.msra.mxu0 0.0
        %1214 = vmatprep.subr.mxu0 0.0
        %1215 = vmatpush1.msra.mxu0 0.0
        %1216 = vmatprep.subr.mxu0 0.0
        %1217 = vmatpush1.msra.mxu0 0.0
        %1218 = vmatprep.subr.mxu0 0.0
        %1219 = vmatpush1.msra.mxu0 0.0
        %1220 = vmatprep.subr.mxu0 0.0
        %1221 = vmatpush1.msra.mxu0 0.0
        %1222 = vmatprep.subr.mxu0 0.0
        %1223 = vmatpush1.msra.mxu0 0.0
        %1224 = vmatprep.subr.mxu0 0.0
        %1225 = vmatpush1.msra.mxu0 0.0
        %1226 = vmatprep.subr.mxu0 0.0
        %1227 = vmatpush1.msra.mxu0 0.0
        %1228 = vmatprep.subr.mxu0 0.0
        %1229 = vmatpush1.msra.mxu0 0.0
        %1230 = vmatprep.subr.mxu0 0.0
        %1231 = vmatpush1.msra.mxu0 0.0
        %1232 = vmatprep.subr.mxu0 0.0
        %1233 = vmatpush1.msra.mxu0 0.0
        %1234 = vmatprep.subr.mxu0 0.0
        %1235 = vmatpush1.msra.mxu0 0.0
        %1236 = vmatprep.subr.mxu0 0.0
        %1237 = vmatpush1.msra.mxu0 0.0
        %1238 = vmatprep.subr.mxu0 0.0
        %1239 = vmatpush1.msra.mxu0 0.0
        %1240 = vmatprep.subr.mxu0 0.0
        %1241 = vmatpush1.msra.mxu0 0.0
        %1242 = vmatprep.mubr.f32.mxu0 0.0
        %v1243 = vand.u32 %v1172, 4294901760
        %v1244 = vsub.f32 %v1172, %v1243
        %v1245 = vand.u32 %v1244, 4294901760
        %v1246 = vsub.f32 %v1244, %v1245
        %v1247 = vand.u32 %v1246, 4294901760
        %1248 = vmatmul.mubr.f32.gmra.mrb[0].mxu0 %v1247
        %v1249 = vpop.f32.mrb[0].mxu0
        %v1250 = vadd.f32 0.0, %v1249
        %v1251 = vpop.f32.mrb[0].mxu0
        %1252 = vdwg.mxu0
        %1253 = vmatprep.subr.mxu0 0.0
        %v1254 = vand.u32 %v185, 4294901760
        %v1255 = vsub.f32 %v185, %v1254
        %v1256 = vand.u32 %v1255, 4294901760
        %v1257 = vsub.f32 %v1255, %v1256
        %v1258 = vand.u32 %v1257, 4294901760
        %1259 = vmatpush1.msra.mxu0 %v1258
        %1260 = vmatprep.subr.mxu0 0.0
        %v1261 = vand.u32 %v186, 4294901760
        %v1262 = vsub.f32 %v186, %v1261
        %v1263 = vand.u32 %v1262, 4294901760
        %v1264 = vsub.f32 %v1262, %v1263
        %v1265 = vand.u32 %v1264, 4294901760
        %1266 = vmatpush1.msra.mxu0 %v1265
        %1267 = vmatprep.subr.mxu0 0.0
        %v1268 = vand.u32 %v187, 4294901760
        %v1269 = vsub.f32 %v187, %v1268
        %v1270 = vand.u32 %v1269, 4294901760
        %v1271 = vsub.f32 %v1269, %v1270
        %v1272 = vand.u32 %v1271, 4294901760
        %1273 = vmatpush1.msra.mxu0 %v1272
        %1274 = vmatprep.subr.mxu0 0.0
        %v1275 = vand.u32 %v188, 4294901760
        %v1276 = vsub.f32 %v188, %v1275
        %v1277 = vand.u32 %v1276, 4294901760
        %v1278 = vsub.f32 %v1276, %v1277
        %v1279 = vand.u32 %v1278, 4294901760
        %1280 = vmatpush1.msra.mxu0 %v1279
        %1281 = vmatprep.subr.mxu0 0.0
        %1282 = vmatpush1.msra.mxu0 0.0
        %1283 = vmatprep.subr.mxu0 0.0
        %1284 = vmatpush1.msra.mxu0 0.0
        %1285 = vmatprep.subr.mxu0 0.0
        %1286 = vmatpush1.msra.mxu0 0.0
        %1287 = vmatprep.subr.mxu0 0.0
        %1288 = vmatpush1.msra.mxu0 0.0
        %1289 = vmatprep.subr.mxu0 0.0
        %1290 = vmatpush1.msra.mxu0 0.0
        %1291 = vmatprep.subr.mxu0 0.0
        %1292 = vmatpush1.msra.mxu0 0.0
        %1293 = vmatprep.subr.mxu0 0.0
        %1294 = vmatpush1.msra.mxu0 0.0
        %1295 = vmatprep.subr.mxu0 0.0
        %1296 = vmatpush1.msra.mxu0 0.0
        %1297 = vmatprep.subr.mxu0 0.0
        %1298 = vmatpush1.msra.mxu0 0.0
        %1299 = vmatprep.subr.mxu0 0.0
        %1300 = vmatpush1.msra.mxu0 0.0
        %1301 = vmatprep.subr.mxu0 0.0
        %1302 = vmatpush1.msra.mxu0 0.0
        %1303 = vmatprep.subr.mxu0 0.0
        %1304 = vmatpush1.msra.mxu0 0.0
        %1305 = vmatprep.subr.mxu0 0.0
        %1306 = vmatpush1.msra.mxu0 0.0
        %1307 = vmatprep.subr.mxu0 0.0
        %1308 = vmatpush1.msra.mxu0 0.0
        %1309 = vmatprep.subr.mxu0 0.0
        %1310 = vmatpush1.msra.mxu0 0.0
        %1311 = vmatprep.subr.mxu0 0.0
        %1312 = vmatpush1.msra.mxu0 0.0
        %1313 = vmatprep.subr.mxu0 0.0
        %1314 = vmatpush1.msra.mxu0 0.0
        %1315 = vmatprep.subr.mxu0 0.0
        %1316 = vmatpush1.msra.mxu0 0.0
        %1317 = vmatprep.subr.mxu0 0.0
        %1318 = vmatpush1.msra.mxu0 0.0
        %1319 = vmatprep.subr.mxu0 0.0
        %1320 = vmatpush1.msra.mxu0 0.0
        %1321 = vmatprep.subr.mxu0 0.0
        %1322 = vmatpush1.msra.mxu0 0.0
        %1323 = vmatprep.subr.mxu0 0.0
        %1324 = vmatpush1.msra.mxu0 0.0
        %1325 = vmatprep.subr.mxu0 0.0
        %1326 = vmatpush1.msra.mxu0 0.0
        %1327 = vmatprep.subr.mxu0 0.0
        %1328 = vmatpush1.msra.mxu0 0.0
        %1329 = vmatprep.subr.mxu0 0.0
        %1330 = vmatpush1.msra.mxu0 0.0
        %1331 = vmatprep.subr.mxu0 0.0
        %1332 = vmatpush1.msra.mxu0 0.0
        %1333 = vmatprep.subr.mxu0 0.0
        %1334 = vmatpush1.msra.mxu0 0.0
        %1335 = vmatprep.subr.mxu0 0.0
        %1336 = vmatpush1.msra.mxu0 0.0
        %1337 = vmatprep.mubr.f32.mxu0 0.0
        %v1338 = vand.u32 %v1172, 4294901760
        %1339 = vmatmul.mubr.f32.gmra.mrb[0].mxu0 %v1338
        %v1340 = vpop.f32.mrb[0].mxu0
        %v1341 = vadd.f32 %v1250, %v1340
        %v1342 = vpop.f32.mrb[0].mxu0
        %1343 = vdwg.mxu0
        %1344 = vmatprep.subr.mxu0 0.0
        %v1345 = vand.u32 %v185, 4294901760
        %v1346 = vsub.f32 %v185, %v1345
        %1347 = vmatpush1.msra.mxu0 %v1346
        %1348 = vmatprep.subr.mxu0 0.0
        %v1349 = vand.u32 %v186, 4294901760
        %v1350 = vsub.f32 %v186, %v1349
        %1351 = vmatpush1.msra.mxu0 %v1350
        %1352 = vmatprep.subr.mxu0 0.0
        %v1353 = vand.u32 %v187, 4294901760
        %v1354 = vsub.f32 %v187, %v1353
        %1355 = vmatpush1.msra.mxu0 %v1354
        %1356 = vmatprep.subr.mxu0 0.0
        %v1357 = vand.u32 %v188, 4294901760
        %v1358 = vsub.f32 %v188, %v1357
        %1359 = vmatpush1.msra.mxu0 %v1358
        %1360 = vmatprep.subr.mxu0 0.0
        %1361 = vmatpush1.msra.mxu0 0.0
        %1362 = vmatprep.subr.mxu0 0.0
        %1363 = vmatpush1.msra.mxu0 0.0
        %1364 = vmatprep.subr.mxu0 0.0
        %1365 = vmatpush1.msra.mxu0 0.0
        %1366 = vmatprep.subr.mxu0 0.0
        %1367 = vmatpush1.msra.mxu0 0.0
        %1368 = vmatprep.subr.mxu0 0.0
        %1369 = vmatpush1.msra.mxu0 0.0
        %1370 = vmatprep.subr.mxu0 0.0
        %1371 = vmatpush1.msra.mxu0 0.0
        %1372 = vmatprep.subr.mxu0 0.0
        %1373 = vmatpush1.msra.mxu0 0.0
        %1374 = vmatprep.subr.mxu0 0.0
        %1375 = vmatpush1.msra.mxu0 0.0
        %1376 = vmatprep.subr.mxu0 0.0
        %1377 = vmatpush1.msra.mxu0 0.0
        %1378 = vmatprep.subr.mxu0 0.0
        %1379 = vmatpush1.msra.mxu0 0.0
        %1380 = vmatprep.subr.mxu0 0.0
        %1381 = vmatpush1.msra.mxu0 0.0
        %1382 = vmatprep.subr.mxu0 0.0
        %1383 = vmatpush1.msra.mxu0 0.0
        %1384 = vmatprep.subr.mxu0 0.0
        %1385 = vmatpush1.msra.mxu0 0.0
        %1386 = vmatprep.subr.mxu0 0.0
        %1387 = vmatpush1.msra.mxu0 0.0
        %1388 = vmatprep.subr.mxu0 0.0
        %1389 = vmatpush1.msra.mxu0 0.0
        %1390 = vmatprep.subr.mxu0 0.0
        %1391 = vmatpush1.msra.mxu0 0.0
        %1392 = vmatprep.subr.mxu0 0.0
        %1393 = vmatpush1.msra.mxu0 0.0
        %1394 = vmatprep.subr.mxu0 0.0
        %1395 = vmatpush1.msra.mxu0 0.0
        %1396 = vmatprep.subr.mxu0 0.0
        %1397 = vmatpush1.msra.mxu0 0.0
        %1398 = vmatprep.subr.mxu0 0.0
        %1399 = vmatpush1.msra.mxu0 0.0
        %1400 = vmatprep.subr.mxu0 0.0
        %1401 = vmatpush1.msra.mxu0 0.0
        %1402 = vmatprep.subr.mxu0 0.0
        %1403 = vmatpush1.msra.mxu0 0.0
        %1404 = vmatprep.subr.mxu0 0.0
        %1405 = vmatpush1.msra.mxu0 0.0
        %1406 = vmatprep.subr.mxu0 0.0
        %1407 = vmatpush1.msra.mxu0 0.0
        %1408 = vmatprep.subr.mxu0 0.0
        %1409 = vmatpush1.msra.mxu0 0.0
        %1410 = vmatprep.subr.mxu0 0.0
        %1411 = vmatpush1.msra.mxu0 0.0
        %1412 = vmatprep.subr.mxu0 0.0
        %1413 = vmatpush1.msra.mxu0 0.0
        %1414 = vmatprep.subr.mxu0 0.0
        %1415 = vmatpush1.msra.mxu0 0.0
        %1416 = vmatprep.mubr.f32.mxu0 0.0
        %v1417 = vand.u32 %v1172, 4294901760
        %v1418 = vsub.f32 %v1172, %v1417
        %1419 = vmatmul.mubr.f32.gmra.mrb[0].mxu0 %v1418
        %v1420 = vpop.f32.mrb[0].mxu0
        %v1421 = vadd.f32 %v1341, %v1420
        %v1422 = vpop.f32.mrb[0].mxu0
        %1423 = vdwg.mxu0
        %1424 = vmatprep.subr.mxu0 0.0
        %v1425 = vand.u32 %v185, 4294901760
        %1426 = vmatpush1.msra.mxu0 %v1425
        %1427 = vmatprep.subr.mxu0 0.0
        %v1428 = vand.u32 %v186, 4294901760
        %1429 = vmatpush1.msra.mxu0 %v1428
        %1430 = vmatprep.subr.mxu0 0.0
        %v1431 = vand.u32 %v187, 4294901760
        %1432 = vmatpush1.msra.mxu0 %v1431
        %1433 = vmatprep.subr.mxu0 0.0
        %v1434 = vand.u32 %v188, 4294901760
        %1435 = vmatpush1.msra.mxu0 %v1434
        %1436 = vmatprep.subr.mxu0 0.0
        %1437 = vmatpush1.msra.mxu0 0.0
        %1438 = vmatprep.subr.mxu0 0.0
        %1439 = vmatpush1.msra.mxu0 0.0
        %1440 = vmatprep.subr.mxu0 0.0
        %1441 = vmatpush1.msra.mxu0 0.0
        %1442 = vmatprep.subr.mxu0 0.0
        %1443 = vmatpush1.msra.mxu0 0.0
        %1444 = vmatprep.subr.mxu0 0.0
        %1445 = vmatpush1.msra.mxu0 0.0
        %1446 = vmatprep.subr.mxu0 0.0
        %1447 = vmatpush1.msra.mxu0 0.0
        %1448 = vmatprep.subr.mxu0 0.0
        %1449 = vmatpush1.msra.mxu0 0.0
        %1450 = vmatprep.subr.mxu0 0.0
        %1451 = vmatpush1.msra.mxu0 0.0
        %1452 = vmatprep.subr.mxu0 0.0
        %1453 = vmatpush1.msra.mxu0 0.0
        %1454 = vmatprep.subr.mxu0 0.0
        %1455 = vmatpush1.msra.mxu0 0.0
        %1456 = vmatprep.subr.mxu0 0.0
        %1457 = vmatpush1.msra.mxu0 0.0
        %1458 = vmatprep.subr.mxu0 0.0
        %1459 = vmatpush1.msra.mxu0 0.0
        %1460 = vmatprep.subr.mxu0 0.0
        %1461 = vmatpush1.msra.mxu0 0.0
        %1462 = vmatprep.subr.mxu0 0.0
        %1463 = vmatpush1.msra.mxu0 0.0
        %1464 = vmatprep.subr.mxu0 0.0
        %1465 = vmatpush1.msra.mxu0 0.0
        %1466 = vmatprep.subr.mxu0 0.0
        %1467 = vmatpush1.msra.mxu0 0.0
        %1468 = vmatprep.subr.mxu0 0.0
        %1469 = vmatpush1.msra.mxu0 0.0
        %1470 = vmatprep.subr.mxu0 0.0
        %1471 = vmatpush1.msra.mxu0 0.0
        %1472 = vmatprep.subr.mxu0 0.0
        %1473 = vmatpush1.msra.mxu0 0.0
        %1474 = vmatprep.subr.mxu0 0.0
        %1475 = vmatpush1.msra.mxu0 0.0
        %1476 = vmatprep.subr.mxu0 0.0
        %1477 = vmatpush1.msra.mxu0 0.0
        %1478 = vmatprep.subr.mxu0 0.0
        %1479 = vmatpush1.msra.mxu0 0.0
        %1480 = vmatprep.subr.mxu0 0.0
        %1481 = vmatpush1.msra.mxu0 0.0
        %1482 = vmatprep.subr.mxu0 0.0
        %1483 = vmatpush1.msra.mxu0 0.0
        %1484 = vmatprep.subr.mxu0 0.0
        %1485 = vmatpush1.msra.mxu0 0.0
        %1486 = vmatprep.subr.mxu0 0.0
        %1487 = vmatpush1.msra.mxu0 0.0
        %1488 = vmatprep.subr.mxu0 0.0
        %1489 = vmatpush1.msra.mxu0 0.0
        %1490 = vmatprep.subr.mxu0 0.0
        %1491 = vmatpush1.msra.mxu0 0.0
        %1492 = vmatprep.mubr.f32.mxu0 0.0
        %v1493 = vand.u32 %v1172, 4294901760
        %v1494 = vsub.f32 %v1172, %v1493
        %v1495 = vand.u32 %v1494, 4294901760
        %1496 = vmatmul.mubr.f32.gmra.mrb[0].mxu0 %v1495
        %v1497 = vpop.f32.mrb[0].mxu0
        %v1498 = vadd.f32 %v1421, %v1497
        %v1499 = vpop.f32.mrb[0].mxu0
        %1500 = vdwg.mxu0
        %1501 = vmatprep.subr.mxu0 0.0
        %v1502 = vand.u32 %v185, 4294901760
        %v1503 = vsub.f32 %v185, %v1502
        %v1504 = vand.u32 %v1503, 4294901760
        %1505 = vmatpush1.msra.mxu0 %v1504
        %1506 = vmatprep.subr.mxu0 0.0
        %v1507 = vand.u32 %v186, 4294901760
        %v1508 = vsub.f32 %v186, %v1507
        %v1509 = vand.u32 %v1508, 4294901760
        %1510 = vmatpush1.msra.mxu0 %v1509
        %1511 = vmatprep.subr.mxu0 0.0
        %v1512 = vand.u32 %v187, 4294901760
        %v1513 = vsub.f32 %v187, %v1512
        %v1514 = vand.u32 %v1513, 4294901760
        %1515 = vmatpush1.msra.mxu0 %v1514
        %1516 = vmatprep.subr.mxu0 0.0
        %v1517 = vand.u32 %v188, 4294901760
        %v1518 = vsub.f32 %v188, %v1517
        %v1519 = vand.u32 %v1518, 4294901760
        %1520 = vmatpush1.msra.mxu0 %v1519
        %1521 = vmatprep.subr.mxu0 0.0
        %1522 = vmatpush1.msra.mxu0 0.0
        %1523 = vmatprep.subr.mxu0 0.0
        %1524 = vmatpush1.msra.mxu0 0.0
        %1525 = vmatprep.subr.mxu0 0.0
        %1526 = vmatpush1.msra.mxu0 0.0
        %1527 = vmatprep.subr.mxu0 0.0
        %1528 = vmatpush1.msra.mxu0 0.0
        %1529 = vmatprep.subr.mxu0 0.0
        %1530 = vmatpush1.msra.mxu0 0.0
        %1531 = vmatprep.subr.mxu0 0.0
        %1532 = vmatpush1.msra.mxu0 0.0
        %1533 = vmatprep.subr.mxu0 0.0
        %1534 = vmatpush1.msra.mxu0 0.0
        %1535 = vmatprep.subr.mxu0 0.0
        %1536 = vmatpush1.msra.mxu0 0.0
        %1537 = vmatprep.subr.mxu0 0.0
        %1538 = vmatpush1.msra.mxu0 0.0
        %1539 = vmatprep.subr.mxu0 0.0
        %1540 = vmatpush1.msra.mxu0 0.0
        %1541 = vmatprep.subr.mxu0 0.0
        %1542 = vmatpush1.msra.mxu0 0.0
        %1543 = vmatprep.subr.mxu0 0.0
        %1544 = vmatpush1.msra.mxu0 0.0
        %1545 = vmatprep.subr.mxu0 0.0
        %1546 = vmatpush1.msra.mxu0 0.0
        %1547 = vmatprep.subr.mxu0 0.0
        %1548 = vmatpush1.msra.mxu0 0.0
        %1549 = vmatprep.subr.mxu0 0.0
        %1550 = vmatpush1.msra.mxu0 0.0
        %1551 = vmatprep.subr.mxu0 0.0
        %1552 = vmatpush1.msra.mxu0 0.0
        %1553 = vmatprep.subr.mxu0 0.0
        %1554 = vmatpush1.msra.mxu0 0.0
        %1555 = vmatprep.subr.mxu0 0.0
        %1556 = vmatpush1.msra.mxu0 0.0
        %1557 = vmatprep.subr.mxu0 0.0
        %1558 = vmatpush1.msra.mxu0 0.0
        %1559 = vmatprep.subr.mxu0 0.0
        %1560 = vmatpush1.msra.mxu0 0.0
        %1561 = vmatprep.subr.mxu0 0.0
        %1562 = vmatpush1.msra.mxu0 0.0
        %1563 = vmatprep.subr.mxu0 0.0
        %1564 = vmatpush1.msra.mxu0 0.0
        %1565 = vmatprep.subr.mxu0 0.0
        %1566 = vmatpush1.msra.mxu0 0.0
        %1567 = vmatprep.subr.mxu0 0.0
        %1568 = vmatpush1.msra.mxu0 0.0
        %1569 = vmatprep.subr.mxu0 0.0
        %1570 = vmatpush1.msra.mxu0 0.0
        %1571 = vmatprep.subr.mxu0 0.0
        %1572 = vmatpush1.msra.mxu0 0.0
        %1573 = vmatprep.subr.mxu0 0.0
        %1574 = vmatpush1.msra.mxu0 0.0
        %1575 = vmatprep.subr.mxu0 0.0
        %1576 = vmatpush1.msra.mxu0 0.0
        %1577 = vmatprep.mubr.f32.mxu0 0.0
        %v1578 = vand.u32 %v1172, 4294901760
        %1579 = vmatmul.mubr.f32.gmra.mrb[0].mxu0 %v1578
        %v1580 = vpop.f32.mrb[0].mxu0
        %v1581 = vadd.f32 %v1498, %v1580
        %v1582 = vpop.f32.mrb[0].mxu0
        %1583 = vdwg.mxu0
        %1584 = vmatprep.subr.mxu0 0.0
        %v1585 = vand.u32 %v185, 4294901760
        %1586 = vmatpush1.msra.mxu0 %v1585
        %1587 = vmatprep.subr.mxu0 0.0
        %v1588 = vand.u32 %v186, 4294901760
        %1589 = vmatpush1.msra.mxu0 %v1588
        %1590 = vmatprep.subr.mxu0 0.0
        %v1591 = vand.u32 %v187, 4294901760
        %1592 = vmatpush1.msra.mxu0 %v1591
        %1593 = vmatprep.subr.mxu0 0.0
        %v1594 = vand.u32 %v188, 4294901760
        %1595 = vmatpush1.msra.mxu0 %v1594
        %1596 = vmatprep.subr.mxu0 0.0
        %1597 = vmatpush1.msra.mxu0 0.0
        %1598 = vmatprep.subr.mxu0 0.0
        %1599 = vmatpush1.msra.mxu0 0.0
        %1600 = vmatprep.subr.mxu0 0.0
        %1601 = vmatpush1.msra.mxu0 0.0
        %1602 = vmatprep.subr.mxu0 0.0
        %1603 = vmatpush1.msra.mxu0 0.0
        %1604 = vmatprep.subr.mxu0 0.0
        %1605 = vmatpush1.msra.mxu0 0.0
        %1606 = vmatprep.subr.mxu0 0.0
        %1607 = vmatpush1.msra.mxu0 0.0
        %1608 = vmatprep.subr.mxu0 0.0
        %1609 = vmatpush1.msra.mxu0 0.0
        %1610 = vmatprep.subr.mxu0 0.0
        %1611 = vmatpush1.msra.mxu0 0.0
        %1612 = vmatprep.subr.mxu0 0.0
        %1613 = vmatpush1.msra.mxu0 0.0
        %1614 = vmatprep.subr.mxu0 0.0
        %1615 = vmatpush1.msra.mxu0 0.0
        %1616 = vmatprep.subr.mxu0 0.0
        %1617 = vmatpush1.msra.mxu0 0.0
        %1618 = vmatprep.subr.mxu0 0.0
        %1619 = vmatpush1.msra.mxu0 0.0
        %1620 = vmatprep.subr.mxu0 0.0
        %1621 = vmatpush1.msra.mxu0 0.0
        %1622 = vmatprep.subr.mxu0 0.0
        %1623 = vmatpush1.msra.mxu0 0.0
        %1624 = vmatprep.subr.mxu0 0.0
        %1625 = vmatpush1.msra.mxu0 0.0
        %1626 = vmatprep.subr.mxu0 0.0
        %1627 = vmatpush1.msra.mxu0 0.0
        %1628 = vmatprep.subr.mxu0 0.0
        %1629 = vmatpush1.msra.mxu0 0.0
        %1630 = vmatprep.subr.mxu0 0.0
        %1631 = vmatpush1.msra.mxu0 0.0
        %1632 = vmatprep.subr.mxu0 0.0
        %1633 = vmatpush1.msra.mxu0 0.0
        %1634 = vmatprep.subr.mxu0 0.0
        %1635 = vmatpush1.msra.mxu0 0.0
        %1636 = vmatprep.subr.mxu0 0.0
        %1637 = vmatpush1.msra.mxu0 0.0
        %1638 = vmatprep.subr.mxu0 0.0
        %1639 = vmatpush1.msra.mxu0 0.0
        %1640 = vmatprep.subr.mxu0 0.0
        %1641 = vmatpush1.msra.mxu0 0.0
        %1642 = vmatprep.subr.mxu0 0.0
        %1643 = vmatpush1.msra.mxu0 0.0
        %1644 = vmatprep.subr.mxu0 0.0
        %1645 = vmatpush1.msra.mxu0 0.0
        %1646 = vmatprep.subr.mxu0 0.0
        %1647 = vmatpush1.msra.mxu0 0.0
        %1648 = vmatprep.subr.mxu0 0.0
        %1649 = vmatpush1.msra.mxu0 0.0
        %1650 = vmatprep.subr.mxu0 0.0
        %1651 = vmatpush1.msra.mxu0 0.0
        %1652 = vmatprep.mubr.f32.mxu0 0.0
        %v1653 = vand.u32 %v1172, 4294901760
        %1654 = vmatmul.mubr.f32.gmra.mrb[0].mxu0 %v1653
        %v1655 = vpop.f32.mrb[0].mxu0
        %v1656 = vadd.f32 %v1581, %v1655
        %v1657 = vpop.f32.mrb[0].mxu0
        %1658 = vdwg.mxu0
        %v1659 = vadd.f32 %v1166, %v1656
        %v1660 = vmul.f32 %v1659, 3.3333333
        %1661 = vxpose.xlu0.b32.start [1/16] %v1660, 128
        %1662 = vxpose.xlu0.b32.cont [2/16] 0.0, 128
        %1663 = vxpose.xlu0.b32.cont [3/16] 0.0, 128
        %1664 = vxpose.xlu0.b32.cont [4/16] 0.0, 128
        %1665 = vxpose.xlu0.b32.cont [5/16] 0.0, 128
        %1666 = vxpose.xlu0.b32.cont [6/16] 0.0, 128
        %1667 = vxpose.xlu0.b32.cont [7/16] 0.0, 128
        %1668 = vxpose.xlu0.b32.cont [8/16] 0.0, 128
        %1669 = vxpose.xlu0.b32.cont [9/16] 0.0, 128
        %1670 = vxpose.xlu0.b32.cont [10/16] 0.0, 128
        %1671 = vxpose.xlu0.b32.cont [11/16] 0.0, 128
        %1672 = vxpose.xlu0.b32.cont [12/16] 0.0, 128
        %1673 = vxpose.xlu0.b32.cont [13/16] 0.0, 128
        %1674 = vxpose.xlu0.b32.cont [14/16] 0.0, 128
        %1675 = vxpose.xlu0.b32.cont [15/16] 0.0, 128
        %1676 = vxpose.xlu0.b32.end [16/16] 0.0, 128
        %v1677 = vpop.trf.xlu0
        %v1678 = vpop.trf.xlu0
        %v1679 = vpop.trf.xlu0
        %v1680 = vpop.trf.xlu0
        %v1681 = vpop.trf.xlu0
        %v1682 = vpop.trf.xlu0
        %v1683 = vpop.trf.xlu0
        %v1684 = vpop.trf.xlu0
        %v1685 = vpop.trf.xlu0
        %v1686 = vpop.trf.xlu0
        %v1687 = vpop.trf.xlu0
        %v1688 = vpop.trf.xlu0
        %v1689 = vpop.trf.xlu0
        %v1690 = vpop.trf.xlu0
        %v1691 = vpop.trf.xlu0
        %v1692 = vpop.trf.xlu0
        %vm1693 = vcmask 61440
        %1694 = vst.msk [vmem:[%s184] sm:$0x1f] %vm1693, %v1677
        %p1695 = scmp.lt.s32.totalorder %s20, 1
        %s1696 = scalar_select %p1695, %s20, 1
        %p1697 = scmp.lt.s32.totalorder %s21, 0
        %s1698 = scalar_select %p1697, %s21, 0
        %s1699 = sadd.s32 %s1698, %s1696
        %s1700 = smul.addr %s1699, 8
        %s1701 = scalar_lea.vmem %s2, %s1700
        // Predicated region
        $region33: #{tpu_custom_call.1} parent=27 // pred_check
          %p1702 = pneg %p97
        $region34: #{tpu_custom_call.1} parent=27 // pred_check_branch
          %1704 = sbr.rel (%p1702) target = $region36
        $region35: #{tpu_custom_call.1} parent=27 // pred_region
          _
        $region36: #{tpu_custom_call.1} parent=27 // pred_fallthru
          _
      $region28: #{tpu_custom_call.1} parent=5 // pred_fallthru
        _
      %p1705 = scmp.le.s32.totalorder 2, %s11
      // Predicated region
      $region37: #{tpu_custom_call.1} parent=5 // pred_check
        %p1706 = pneg %p1705
      $region38: #{tpu_custom_call.1} parent=5 // pred_check_branch
        %1708 = sbr.rel (%p1706) target = $region40
      $region39: #{tpu_custom_call.1} parent=5 // pred_region
        %s1709 = ssub.s32 %s11, 2
        // Predicated region
        $region41: #{tpu_custom_call.1} parent=39 // pred_check
          %p1710 = pneg %p103
        $region42: #{tpu_custom_call.1} parent=39 // pred_check_branch
          %1712 = sbr.rel (%p1710) target = $region44
        $region43: #{tpu_custom_call.1} parent=39 // pred_region
          %p1713 = scmp.lt.s32.totalorder %s22, 1
          %s1714 = scalar_select %p1713, %s22, 1
          %p1715 = scmp.lt.s32.totalorder %s23, 0
          %s1716 = scalar_select %p1715, %s23, 0
          %s1717 = sadd.s32 %s1716, %s1714
          %s1718 = smul.addr %s1717, 8
          %s1719 = scalar_lea.vmem %s2, %s1718
        $region44: #{tpu_custom_call.1} parent=39 // pred_fallthru
          _
      $region40: #{tpu_custom_call.1} parent=5 // pred_fallthru
        _
    $region6: #{tpu_custom_call.1} parent=1 // loop_footer
      %s15 = sadd.s32 1, %s11
    $region7: #{tpu_custom_call.1} parent=1 // loop_footer_branch
      %10 = sbr.rel target = $region3
    $region8: #{tpu_custom_call.1} parent=1 // loop_exit
      _
    %1720 = vsyncpa [#allocation3], 1
    %s1721 = scalar_lea.sflag [#allocation3], 1
    %1722 = vsyncpa %s1721, 1

</llo_original>
